<compile_context>
chip_gen: v6e
topology: v6e:2x2x1
jax: 0.10.0
libtpu: 0.0.40
codegen_flags: <defaults>
</compile_context>

<pallas_src>
import functools

import jax
import jax.numpy as jnp
from jax.experimental import pallas as pl
from jax.experimental.pallas import tpu as pltpu


def _round_up(x, m):
    return ((x + m - 1) // m) * m


def c_hntm_pretrain_kernel(
    x_ref, eps_ref,
    w_e0_ref, b_e0_ref,
    w_h_ref, b_h_ref,          # fused (mu||logvar) head, lane-padded to 128 cols
    w_d0_ref, b_d0_ref,
    w_d1_ref, b_d1_ref,
    recon_ref, heads_ref,
    *, n_topic,
):
    Z = n_topic
    mm_dtype = w_h_ref.dtype   # bf16 (or f32) matmul operand dtype

    # ---- encoder layer 0: Linear -> (dropout) -> ReLU --------------------
    # TODO(synk): nn.Dropout(p=0.01) in train mode is not modeled; treated as
    # identity (eval-mode semantics) to keep the kernel deterministic.
    hid = jnp.dot(x_ref[...], w_e0_ref[...],
                  preferred_element_type=jnp.float32) + b_e0_ref[...]
    hid = jnp.maximum(hid, 0.0)

    # ---- fused mu/logvar heads (one lane-dense matmul) --------------------
    heads = jnp.dot(hid.astype(mm_dtype), w_h_ref[...],
                    preferred_element_type=jnp.float32) + b_h_ref[...]
    heads_ref[...] = heads                      # packed [TILE_B, 128] output

    mu = heads[:, :Z]
    logvar = heads[:, Z:2 * Z]

    # ---- reparameterize: z = mu + eps * exp(logvar / 2) (all f32) ---------
    z = mu + eps_ref[...] * jnp.exp(logvar * 0.5)

    # ---- decoder layer 0: Linear -> (dropout) -> ReLU ----------------------
    hid2 = jnp.dot(z.astype(mm_dtype), w_d0_ref[...],
                   preferred_element_type=jnp.float32) + b_d0_ref[...]
    hid2 = jnp.maximum(hid2, 0.0)

    # ---- decoder final Linear (no activation) ------------------------------
    recon = jnp.dot(hid2.astype(mm_dtype), w_d1_ref[...],
                    preferred_element_type=jnp.float32) + b_d1_ref[...]
    recon_ref[...] = recon


def c_hntm_pretrain_forward(x, eps, params, *, tile_b=128, use_bf16=True):
    """Batch-tiled Pallas forward. Returns (recon, mu, logvar) in f32.

    Weights/biases are VMEM-resident across the batch grid.
    TODO(synk): for realistic vocab sizes (V ~ 10k-50k) on v7x (64 MiB VMEM),
    w_e0/w_d1 must additionally be tiled over the vocab axis instead of being
    kept fully resident; not needed for these demo shapes.
    """
    B, V = x.shape
    H = params["w_e0"].shape[1]
    Z = params["w_mu"].shape[1]
    mm_dtype = jnp.bfloat16 if use_bf16 else jnp.float32

    # ---- fuse mu/logvar heads and pad the output width to a full lane (128)
    HP = _round_up(2 * Z, 128)
    w_heads = jnp.concatenate([params["w_mu"], params["w_lv"]], axis=1)
    b_heads = jnp.concatenate([params["b_mu"], params["b_lv"]], axis=1)
    if HP > 2 * Z:
        w_heads = jnp.pad(w_heads, ((0, 0), (0, HP - 2 * Z)))
        b_heads = jnp.pad(b_heads, ((0, 0), (0, HP - 2 * Z)))

    # matmul operands in bf16; biases / eps / accumulation stay f32
    w_e0 = params["w_e0"].astype(mm_dtype)
    w_heads = w_heads.astype(mm_dtype)
    w_d0 = params["w_d0"].astype(mm_dtype)
    w_d1 = params["w_d1"].astype(mm_dtype)
    b_e0 = params["b_e0"].astype(jnp.float32)
    b_heads = b_heads.astype(jnp.float32)
    b_d0 = params["b_d0"].astype(jnp.float32)
    b_d1 = params["b_d1"].astype(jnp.float32)

    # ---- pad batch to a multiple of the tile --------------------------------
    n_tiles = pl.cdiv(B, tile_b)
    B_pad = n_tiles * tile_b
    if B_pad != B:
        x = jnp.pad(x, ((0, B_pad - B), (0, 0)))
        eps = jnp.pad(eps, ((0, B_pad - B), (0, 0)))
    x_mm = x.astype(mm_dtype)
    eps = eps.astype(jnp.float32)

    args = (x_mm, eps, w_e0, b_e0, w_heads, b_heads, w_d0, b_d0, w_d1, b_d1)

    def batch_spec(feat):
        return pl.BlockSpec((tile_b, feat), lambda i: (i, 0))

    def resident(shape):
        return pl.BlockSpec(shape, lambda i: (0, 0))

    in_specs = [
        batch_spec(V),                            # x
        batch_spec(Z),                            # eps
        resident((V, H)), resident((1, H)),       # encoder layer 0
        resident((H, HP)), resident((1, HP)),     # fused mu/logvar heads
        resident((Z, H)), resident((1, H)),       # decoder layer 0
        resident((H, V)), resident((1, V)),       # decoder final
    ]
    out_specs = (batch_spec(V), batch_spec(HP))
    out_shape = (
        jax.ShapeDtypeStruct((B_pad, V), jnp.float32),    # recon_x
        jax.ShapeDtypeStruct((B_pad, HP), jnp.float32),   # packed mu||logvar (lane-dense)
    )

    flops = 2 * B_pad * (V * H + H * HP + Z * H + H * V)
    in_bytes = sum(int(a.size) * a.dtype.itemsize for a in args)
    out_bytes = (B_pad * V + B_pad * HP) * 4
    cost = pl.CostEstimate(
        flops=int(flops),
        transcendentals=int(B_pad * Z),
        bytes_accessed=int(in_bytes + out_bytes),
    )

    recon_pad, heads_pad = pl.pallas_call(
        functools.partial(c_hntm_pretrain_kernel, n_topic=Z),
        out_shape=out_shape,
        grid=(n_tiles,),
        in_specs=in_specs,
        out_specs=out_specs,
        compiler_params=pltpu.CompilerParams(
            dimension_semantics=("parallel",),     # megacore-shard batch on v7x
        ),
        cost_estimate=cost,
    )(*args)

    recon = recon_pad[:B]
    mu = heads_pad[:B, :Z]
    logvar = heads_pad[:B, Z:2 * Z]
    return recon, mu, logvar


def init_params(key, encode_dims, decode_dims):
    """Deterministic synthetic parameters; weights stored as [in, out], biases [1, out]."""
    ks = jax.random.split(key, 6)

    def lin(k, d_in, d_out):
        kw, kb = jax.random.split(k)
        w = jax.random.normal(kw, (d_in, d_out), jnp.float32) * 0.02
        b = jax.random.normal(kb, (1, d_out), jnp.float32) * 0.02
        return w, b

    # encoder: len(encode_dims) - 2 Linear layers  (here: 1 layer V -> H)
    w_e0, b_e0 = lin(ks[0], encode_dims[0], encode_dims[1])
    # heads: H -> Z
    w_mu, b_mu = lin(ks[1], encode_dims[-2], encode_dims[-1])
    w_lv, b_lv = lin(ks[2], encode_dims[-2], encode_dims[-1])
    # decoder: len(encode_dims) - 1 Linear layers  (here: Z -> H, H -> V)
    w_d0, b_d0 = lin(ks[3], decode_dims[0], decode_dims[1])
    w_d1, b_d1 = lin(ks[4], decode_dims[1], decode_dims[2])

    return dict(
        w_e0=w_e0, b_e0=b_e0,
        w_mu=w_mu, b_mu=b_mu,
        w_lv=w_lv, b_lv=b_lv,
        w_d0=w_d0, b_d0=b_d0,
        w_d1=w_d1, b_d1=b_d1,
    )


def reference_forward(x, eps, params, *, use_bf16=True):
    """Pure-JAX reference mirroring the kernel's dtype handling."""
    mm = jnp.bfloat16 if use_bf16 else jnp.float32

    def dot(a, w):
        return jnp.dot(a.astype(mm), w.astype(mm), preferred_element_type=jnp.float32)

    hid = jnp.maximum(dot(x, params["w_e0"]) + params["b_e0"], 0.0)
    mu = dot(hid, params["w_mu"]) + params["b_mu"]
    lv = dot(hid, params["w_lv"]) + params["b_lv"]
    z = mu + eps * jnp.exp(lv * 0.5)
    h2 = jnp.maximum(dot(z, params["w_d0"]) + params["b_d0"], 0.0)
    recon = dot(h2, params["w_d1"]) + params["b_d1"]
    return recon, mu, lv


if __name__ == "__main__":
    # Shapes consistent with the module's constructor:
    #   vocab_size = 256, encode_dims = [256, 128, 32], decode_dims = [32, 128, 256]
    # Batch 256 with TILE_B=128 exercises the batch grid (2 steps).
    B = 256
    encode_dims = [256, 128, 32]
    decode_dims = [32, 128, 256]

    key = jax.random.PRNGKey(0)
    k_param, k_x, k_eps = jax.random.split(key, 3)

    params = init_params(k_param, encode_dims, decode_dims)
    # bag-of-words style non-negative input
    x = jax.random.uniform(k_x, (B, encode_dims[0]), jnp.float32)
    # reparameterization noise (torch.randn_like(mu)) generated host-side
    eps = jax.random.normal(k_eps, (B, encode_dims[-1]), jnp.float32)

    recon_x, mu, logvar = c_hntm_pretrain_forward(
        x, eps, params, tile_b=128, use_bf16=True)
    jax.block_until_ready((recon_x, mu, logvar))

    assert recon_x.shape == (B, decode_dims[-1])
    assert mu.shape == (B, encode_dims[-1])
    assert logvar.shape == (B, encode_dims[-1])

    # sanity check against an equivalently-cast plain-JAX reference
    recon_ref, mu_ref, lv_ref = reference_forward(x, eps, params, use_bf16=True)
    assert jnp.allclose(mu, mu_ref, atol=1e-2, rtol=1e-2)
    assert jnp.allclose(logvar, lv_ref, atol=1e-2, rtol=1e-2)
    assert jnp.allclose(recon_x, recon_ref, atol=1e-2, rtol=1e-2)

    print("KERNEL_OK")
</pallas_src>

<mosaic_0001>
module attributes {stable_mosaic.version = 11 : i64} {
  func.func @c_hntm_pretrain_kernel(%arg0: i32, %arg1: memref<128x256xbf16, #tpu.memory_space<vmem>>, %arg2: memref<128x32xf32, #tpu.memory_space<vmem>>, %arg3: memref<256x128xbf16, #tpu.memory_space<vmem>>, %arg4: memref<1x128xf32, #tpu.memory_space<vmem>>, %arg5: memref<128x128xbf16, #tpu.memory_space<vmem>>, %arg6: memref<1x128xf32, #tpu.memory_space<vmem>>, %arg7: memref<32x128xbf16, #tpu.memory_space<vmem>>, %arg8: memref<1x128xf32, #tpu.memory_space<vmem>>, %arg9: memref<128x256xbf16, #tpu.memory_space<vmem>>, %arg10: memref<1x256xf32, #tpu.memory_space<vmem>>, %arg11: memref<128x256xf32, #tpu.memory_space<vmem>>, %arg12: memref<128x128xf32, #tpu.memory_space<vmem>>) attributes {dimension_semantics = [#tpu.dimension_semantics<parallel>], iteration_bounds = array<i64: 2>, scalar_prefetch = 0 : i64, scratch_operands = 0 : i64, tpu.core_type = #tpu.core_type<tc>, window_params = [{transform_indices = @transform_0, window_bounds = array<i64: 128, 256>}, {transform_indices = @transform_1, window_bounds = array<i64: 128, 32>}, {pipeline_mode = #tpu.pipeline_mode<synchronous>, transform_indices = @transform_2, window_bounds = array<i64: 256, 128>}, {pipeline_mode = #tpu.pipeline_mode<synchronous>, transform_indices = @transform_3, window_bounds = array<i64: 1, 128>}, {pipeline_mode = #tpu.pipeline_mode<synchronous>, transform_indices = @transform_4, window_bounds = array<i64: 128, 128>}, {pipeline_mode = #tpu.pipeline_mode<synchronous>, transform_indices = @transform_5, window_bounds = array<i64: 1, 128>}, {pipeline_mode = #tpu.pipeline_mode<synchronous>, transform_indices = @transform_6, window_bounds = array<i64: 32, 128>}, {pipeline_mode = #tpu.pipeline_mode<synchronous>, transform_indices = @transform_7, window_bounds = array<i64: 1, 128>}, {pipeline_mode = #tpu.pipeline_mode<synchronous>, transform_indices = @transform_8, window_bounds = array<i64: 128, 256>}, {pipeline_mode = #tpu.pipeline_mode<synchronous>, transform_indices = @transform_9, window_bounds = array<i64: 1, 256>}, {transform_indices = @transform_10, window_bounds = array<i64: 128, 256>}, {transform_indices = @transform_11, window_bounds = array<i64: 128, 128>}]} {
    %c0 = arith.constant 0 : index
    %c0_0 = arith.constant 0 : index
    %0 = vector.load %arg1[%c0, %c0_0] : memref<128x256xbf16, #tpu.memory_space<vmem>>, vector<128x256xbf16>
    %c0_1 = arith.constant 0 : index
    %c0_2 = arith.constant 0 : index
    %1 = vector.load %arg3[%c0_1, %c0_2] : memref<256x128xbf16, #tpu.memory_space<vmem>>, vector<256x128xbf16>
    %cst = arith.constant dense<0.000000e+00> : vector<128x128xf32>
    %2 = tpu.matmul %0, %1, %cst {dimension_numbers = #tpu.dot_dimension_numbers<[1], [0], [0], [1], [0, 0, 1, 1], [], []>} : vector<128x256xbf16>, vector<256x128xbf16>, vector<128x128xf32> -> vector<128x128xf32>
    %c0_3 = arith.constant 0 : index
    %c0_4 = arith.constant 0 : index
    %3 = vector.load %arg4[%c0_3, %c0_4] : memref<1x128xf32, #tpu.memory_space<vmem>>, vector<1x128xf32>
    %4 = vector.broadcast %3 : vector<1x128xf32> to vector<128x128xf32>
    %5 = arith.addf %2, %4 : vector<128x128xf32>
    %cst_5 = arith.constant 0.000000e+00 : f32
    %6 = vector.broadcast %cst_5 : f32 to vector<128x128xf32>
    %7 = arith.maximumf %5, %6 : vector<128x128xf32>
    %8 = arith.truncf %7 : vector<128x128xf32> to vector<128x128xbf16>
    %c0_6 = arith.constant 0 : index
    %c0_7 = arith.constant 0 : index
    %9 = vector.load %arg5[%c0_6, %c0_7] : memref<128x128xbf16, #tpu.memory_space<vmem>>, vector<128x128xbf16>
    %cst_8 = arith.constant dense<0.000000e+00> : vector<128x128xf32>
    %10 = tpu.matmul %8, %9, %cst_8 {dimension_numbers = #tpu.dot_dimension_numbers<[1], [0], [0], [1], [0, 0, 1, 1], [], []>} : vector<128x128xbf16>, vector<128x128xbf16>, vector<128x128xf32> -> vector<128x128xf32>
    %c0_9 = arith.constant 0 : index
    %c0_10 = arith.constant 0 : index
    %11 = vector.load %arg6[%c0_9, %c0_10] : memref<1x128xf32, #tpu.memory_space<vmem>>, vector<1x128xf32>
    %12 = vector.broadcast %11 : vector<1x128xf32> to vector<128x128xf32>
    %13 = arith.addf %10, %12 : vector<128x128xf32>
    %c0_11 = arith.constant 0 : index
    %c0_12 = arith.constant 0 : index
    %14 = vector.load %arg12[%c0_11, %c0_12] : memref<128x128xf32, #tpu.memory_space<vmem>>, vector<128x128xf32>
    tpu.vector_store %arg12[%c0_11, %c0_12], %13 {strides = array<i32>} : memref<128x128xf32, #tpu.memory_space<vmem>>, vector<128x128xf32>,
    %15 = vector.extract_strided_slice %13 {offsets = [0, 0], sizes = [128, 32], strides = [1, 1]} : vector<128x128xf32> to vector<128x32xf32>
    %16 = vector.extract_strided_slice %13 {offsets = [0, 32], sizes = [128, 32], strides = [1, 1]} : vector<128x128xf32> to vector<128x32xf32>
    %c0_13 = arith.constant 0 : index
    %c0_14 = arith.constant 0 : index
    %17 = vector.load %arg2[%c0_13, %c0_14] : memref<128x32xf32, #tpu.memory_space<vmem>>, vector<128x32xf32>
    %cst_15 = arith.constant 5.000000e-01 : f32
    %18 = vector.broadcast %cst_15 : f32 to vector<128x32xf32>
    %19 = arith.mulf %16, %18 : vector<128x32xf32>
    %20 = math.exp %19 : vector<128x32xf32>
    %21 = arith.mulf %17, %20 : vector<128x32xf32>
    %22 = arith.addf %15, %21 : vector<128x32xf32>
    %23 = arith.truncf %22 : vector<128x32xf32> to vector<128x32xbf16>
    %c0_16 = arith.constant 0 : index
    %c0_17 = arith.constant 0 : index
    %24 = vector.load %arg7[%c0_16, %c0_17] : memref<32x128xbf16, #tpu.memory_space<vmem>>, vector<32x128xbf16>
    %cst_18 = arith.constant dense<0.000000e+00> : vector<128x128xf32>
    %25 = tpu.matmul %23, %24, %cst_18 {dimension_numbers = #tpu.dot_dimension_numbers<[1], [0], [0], [1], [0, 0, 1, 1], [], []>} : vector<128x32xbf16>, vector<32x128xbf16>, vector<128x128xf32> -> vector<128x128xf32>
    %c0_19 = arith.constant 0 : index
    %c0_20 = arith.constant 0 : index
    %26 = vector.load %arg8[%c0_19, %c0_20] : memref<1x128xf32, #tpu.memory_space<vmem>>, vector<1x128xf32>
    %27 = vector.broadcast %26 : vector<1x128xf32> to vector<128x128xf32>
    %28 = arith.addf %25, %27 : vector<128x128xf32>
    %cst_21 = arith.constant 0.000000e+00 : f32
    %29 = vector.broadcast %cst_21 : f32 to vector<128x128xf32>
    %30 = arith.maximumf %28, %29 : vector<128x128xf32>
    %31 = arith.truncf %30 : vector<128x128xf32> to vector<128x128xbf16>
    %c0_22 = arith.constant 0 : index
    %c0_23 = arith.constant 0 : index
    %32 = vector.load %arg9[%c0_22, %c0_23] : memref<128x256xbf16, #tpu.memory_space<vmem>>, vector<128x256xbf16>
    %cst_24 = arith.constant dense<0.000000e+00> : vector<128x256xf32>
    %33 = tpu.matmul %31, %32, %cst_24 {dimension_numbers = #tpu.dot_dimension_numbers<[1], [0], [0], [1], [0, 0, 1, 1], [], []>} : vector<128x128xbf16>, vector<128x256xbf16>, vector<128x256xf32> -> vector<128x256xf32>
    %c0_25 = arith.constant 0 : index
    %c0_26 = arith.constant 0 : index
    %34 = vector.load %arg10[%c0_25, %c0_26] : memref<1x256xf32, #tpu.memory_space<vmem>>, vector<1x256xf32>
    %35 = vector.broadcast %34 : vector<1x256xf32> to vector<128x256xf32>
    %36 = arith.addf %33, %35 : vector<128x256xf32>
    %c0_27 = arith.constant 0 : index
    %c0_28 = arith.constant 0 : index
    %37 = vector.load %arg11[%c0_27, %c0_28] : memref<128x256xf32, #tpu.memory_space<vmem>>, vector<128x256xf32>
    tpu.vector_store %arg11[%c0_27, %c0_28], %36 {strides = array<i32>} : memref<128x256xf32, #tpu.memory_space<vmem>>, vector<128x256xf32>,
    return
  }
  func.func @transform_0(%arg0: i32) -> (i32, i32) {
    %c0_i32 = arith.constant 0 : i32
    %c0_i32_0 = arith.constant 0 : i32
    return %arg0, %c0_i32 : i32, i32
  }
  func.func @transform_1(%arg0: i32) -> (i32, i32) {
    %c0_i32 = arith.constant 0 : i32
    %c0_i32_0 = arith.constant 0 : i32
    return %arg0, %c0_i32 : i32, i32
  }
  func.func @transform_2(%arg0: i32) -> (i32, i32) {
    %c0_i32 = arith.constant 0 : i32
    %c0_i32_0 = arith.constant 0 : i32
    %c0_i32_1 = arith.constant 0 : i32
    return %c0_i32, %c0_i32_0 : i32, i32
  }
  func.func @transform_3(%arg0: i32) -> (i32, i32) {
    %c0_i32 = arith.constant 0 : i32
    %c0_i32_0 = arith.constant 0 : i32
    %c0_i32_1 = arith.constant 0 : i32
    return %c0_i32, %c0_i32_0 : i32, i32
  }
  func.func @transform_4(%arg0: i32) -> (i32, i32) {
    %c0_i32 = arith.constant 0 : i32
    %c0_i32_0 = arith.constant 0 : i32
    %c0_i32_1 = arith.constant 0 : i32
    return %c0_i32, %c0_i32_0 : i32, i32
  }
  func.func @transform_5(%arg0: i32) -> (i32, i32) {
    %c0_i32 = arith.constant 0 : i32
    %c0_i32_0 = arith.constant 0 : i32
    %c0_i32_1 = arith.constant 0 : i32
    return %c0_i32, %c0_i32_0 : i32, i32
  }
  func.func @transform_6(%arg0: i32) -> (i32, i32) {
    %c0_i32 = arith.constant 0 : i32
    %c0_i32_0 = arith.constant 0 : i32
    %c0_i32_1 = arith.constant 0 : i32
    return %c0_i32, %c0_i32_0 : i32, i32
  }
  func.func @transform_7(%arg0: i32) -> (i32, i32) {
    %c0_i32 = arith.constant 0 : i32
    %c0_i32_0 = arith.constant 0 : i32
    %c0_i32_1 = arith.constant 0 : i32
    return %c0_i32, %c0_i32_0 : i32, i32
  }
  func.func @transform_8(%arg0: i32) -> (i32, i32) {
    %c0_i32 = arith.constant 0 : i32
    %c0_i32_0 = arith.constant 0 : i32
    %c0_i32_1 = arith.constant 0 : i32
    return %c0_i32, %c0_i32_0 : i32, i32
  }
  func.func @transform_9(%arg0: i32) -> (i32, i32) {
    %c0_i32 = arith.constant 0 : i32
    %c0_i32_0 = arith.constant 0 : i32
    %c0_i32_1 = arith.constant 0 : i32
    return %c0_i32, %c0_i32_0 : i32, i32
  }
  func.func @transform_10(%arg0: i32) -> (i32, i32) {
    %c0_i32 = arith.constant 0 : i32
    %c0_i32_0 = arith.constant 0 : i32
    return %arg0, %c0_i32 : i32, i32
  }
  func.func @transform_11(%arg0: i32) -> (i32, i32) {
    %c0_i32 = arith.constant 0 : i32
    %c0_i32_0 = arith.constant 0 : i32
    return %arg0, %c0_i32 : i32, i32
  }
}

</mosaic_0001>

<llo_original>
// kernel: tpu_custom_call.1
$region0: #{tpu_custom_call.1}
  #allocation0 [shape = 'u32[]', space=smem, size = 0x4, offset = 0x4, fixed_abs, tag = 'smem constant byte address 0x4 - core index']
  #allocation1 [shape = 'u32[144,128]{1,0:T(1,128)}', space=vmem, size = 0x12000, scoped, tag = 'internal scratch']
  %s0 = inlined_call_operand.vmem [shape: bf16[256,256], index: 0, kind: input, shape index: {}]
  %s1 = inlined_call_operand.vmem [shape: f32[256,32], index: 1, kind: input, shape index: {}]
  %s2 = inlined_call_operand.hbm [shape: bf16[256,128], index: 2, kind: input, shape index: {}]
  %s3 = inlined_call_operand.vmem [shape: f32[1,128], index: 3, kind: input, shape index: {}]
  %s4 = inlined_call_operand.vmem [shape: bf16[128,128], index: 4, kind: input, shape index: {}]
  %s5 = inlined_call_operand.vmem [shape: f32[1,128], index: 5, kind: input, shape index: {}]
  %s6 = inlined_call_operand.hbm [shape: bf16[32,128], index: 6, kind: input, shape index: {}]
  %s7 = inlined_call_operand.vmem [shape: f32[1,128], index: 7, kind: input, shape index: {}]
  %s8 = inlined_call_operand.hbm [shape: bf16[128,256], index: 8, kind: input, shape index: {}]
  %s9 = inlined_call_operand.vmem [shape: f32[1,256], index: 9, kind: input, shape index: {}]
  %s10 = inlined_call_operand.hbm [shape: f32[256,256], index: 10, kind: output, shape index: {0}]
  %s11 = inlined_call_operand.hbm [shape: f32[256,128], index: 11, kind: output, shape index: {1}]
  %12 = xla_tuple %s10, %s11
  %s13 = sld [smem:[#allocation0]]
  $region93: #{tpu_custom_call.1} parent=0
    _
  %s15 = ssub.s32 1, %s13
  %s16 = scalar_select 0, %s15, %s13
  $region1: #{tpu_custom_call.1} parent=0
    #allocation2 [shape = 'u8[65536]{0}', space=vmem, size = 0x10000, scoped, tag = 'input window, operand 2, single buffered']
    #allocation3 [shape = 's32[2]{0}', space=sflag, size = 0x8, scoped, tag = 'scoped memory for tpu_custom_call.1']
    #allocation4 [shape = 's32[2]{0}', space=sflag, size = 0x8, scoped, tag = 'scoped memory for tpu_custom_call.1']
    #allocation5 [shape = 'u8[8192]{0}', space=vmem, size = 0x2000, scoped, tag = 'input window, operand 6, single buffered']
    #allocation6 [shape = 's32[1]{0}', space=sflag, size = 0x4, scoped, tag = 'scoped memory for tpu_custom_call.1']
    #allocation7 [shape = 'u8[65536]{0}', space=vmem, size = 0x10000, scoped, tag = 'input window, operand 8, single buffered']
    #allocation8 [shape = 'u8[262144]{0}', space=vmem, size = 0x40000, scoped, tag = 'output window, operand 0']
    #allocation9 [shape = 'u8[131072]{0}', space=vmem, size = 0x20000, scoped, tag = 'output window, operand 1']
    #allocation10 [shape = 's32[2]{0}', space=sflag, size = 0x8, scoped, tag = 'scoped memory for tpu_custom_call.1']
    %17 = vsyncpa [#allocation3], 0
    %18 = vsyncpa [#allocation6], 0
    %19 = vsyncpa [#allocation4], 0
    %s20 = scalar_lea.sflag [#allocation4], 1
    %21 = vsyncpa %s20, 0
    %22 = vsyncpa [#allocation10], 0
    %s23 = scalar_lea.sflag [#allocation10], 1
    %24 = vsyncpa %s23, 0
    loop: start=0, step=1, limit=4
    $region2: #{tpu_custom_call.1} parent=1 // loop_pre_header
      _
    $region3: #{tpu_custom_call.1} parent=1 // loop_header
      %s26 = sphi 0, %s30
      %p27 = scmp.ge.s32.totalorder %s26, 4
      %s36 = sphi 0, %s38
      %s39 = sphi 0, %s36
      %s40 = sphi 0, %s39
      %s56 = sphi 0, %s40
      %s62 = sphi 0, %s64
      %s65 = sphi 0, %s62
      %s66 = sphi 0, %s65
      %s82 = sphi 0, %s66
      %s86 = sphi 0, %s86
      %s88 = sphi 0, %s86
      %s89 = sphi 0, %s88
      %s103 = sphi 0, %s89
      %s107 = sphi 0, %s107
      %s109 = sphi 0, %s107
      %s110 = sphi 0, %s109
      %s124 = sphi 0, %s110
      %s128 = sphi 0, %s128
      %s130 = sphi 0, %s128
      %s131 = sphi 0, %s130
      %s145 = sphi 0, %s131
      %s149 = sphi 0, %s149
      %s151 = sphi 0, %s149
      %s152 = sphi 0, %s151
      %s166 = sphi 0, %s152
      %s170 = sphi 0, %s170
      %s172 = sphi 0, %s170
      %s173 = sphi 0, %s172
      %s187 = sphi 0, %s173
      %s191 = sphi 0, %s191
      %s193 = sphi 0, %s191
      %s194 = sphi 0, %s193
      %s208 = sphi 0, %s194
      %s212 = sphi 0, %s212
      %s214 = sphi 0, %s212
      %s215 = sphi 0, %s214
      %s229 = sphi 0, %s215
      %s233 = sphi 0, %s233
      %s235 = sphi 0, %s233
      %s236 = sphi 0, %s235
      %s250 = sphi 0, %s236
      %s256 = sphi 0, %s258
      %s259 = sphi 0, %s256
      %s260 = sphi 0, %s259
      %s276 = sphi 0, %s260
      %s282 = sphi 0, %s284
      %s285 = sphi 0, %s282
      %s286 = sphi 0, %s285
      %s302 = sphi 0, %s286
    $region4: #{tpu_custom_call.1} parent=1 // loop_header_branch
      %29 = sbr.rel (%p27) target = $region8
    $region5: #{tpu_custom_call.1} parent=1 // loop_body
      %s31 = ssub.s32 %s26, 1
      %s32 = ssub.s32 %s26, 2
      %s33 = sadd.s32 %s26, 1
      %s34 = ssub.s32 %s26, %s33
      %p35 = scmp.eq.s32.totalorder %s34, 0
      %s37 = sadd.s32 %s36, 1
      %s38 = scalar_select %p35, %s36, %s37
      %p41 = pneg %p35
      %p42 = scmp.eq.s32.totalorder %s26, 1
      %p43 = por %p41, %p42
      %p44 = scmp.ne.s32.totalorder %s36, %s39
      %p45 = scmp.eq.s32.totalorder %s26, 0
      %p46 = por %p44, %p45
      %p47 = scmp.ne.s32.totalorder %s36, %s39
      %p48 = scmp.eq.s32.totalorder %s31, 1
      %p49 = por %p47, %p48
      %p50 = scmp.ne.s32.totalorder %s39, %s40
      %p51 = scmp.eq.s32.totalorder %s31, 0
      %p52 = por %p50, %p51
      %p53 = scmp.ne.s32.totalorder %s39, %s40
      %p54 = scmp.eq.s32.totalorder %s32, 1
      %p55 = por %p53, %p54
      %p57 = scmp.ne.s32.totalorder %s40, %s56
      %p58 = scmp.eq.s32.totalorder %s32, 0
      %p59 = por %p57, %p58
      %s60 = ssub.s32 %s26, %s33
      %p61 = scmp.eq.s32.totalorder %s60, 0
      %s63 = sadd.s32 %s62, 1
      %s64 = scalar_select %p61, %s62, %s63
      %p67 = pneg %p61
      %p68 = scmp.eq.s32.totalorder %s26, 1
      %p69 = por %p67, %p68
      %p70 = scmp.ne.s32.totalorder %s62, %s65
      %p71 = scmp.eq.s32.totalorder %s26, 0
      %p72 = por %p70, %p71
      %p73 = scmp.ne.s32.totalorder %s62, %s65
      %p74 = scmp.eq.s32.totalorder %s31, 1
      %p75 = por %p73, %p74
      %p76 = scmp.ne.s32.totalorder %s65, %s66
      %p77 = scmp.eq.s32.totalorder %s31, 0
      %p78 = por %p76, %p77
      %p79 = scmp.ne.s32.totalorder %s65, %s66
      %p80 = scmp.eq.s32.totalorder %s32, 1
      %p81 = por %p79, %p80
      %p83 = scmp.ne.s32.totalorder %s66, %s82
      %p84 = scmp.eq.s32.totalorder %s32, 0
      %p85 = por %p83, %p84
      %s87 = sadd.s32 %s86, 1
      %p90 = scmp.eq.s32.totalorder %s26, 1
      %p91 = scmp.ne.s32.totalorder %s86, %s88
      %p92 = scmp.eq.s32.totalorder %s26, 0
      %p93 = por %p91, %p92
      %p94 = scmp.ne.s32.totalorder %s86, %s88
      %p95 = scmp.eq.s32.totalorder %s31, 1
      %p96 = por %p94, %p95
      %p97 = scmp.ne.s32.totalorder %s88, %s89
      %p98 = scmp.eq.s32.totalorder %s31, 0
      %p99 = por %p97, %p98
      %p100 = scmp.ne.s32.totalorder %s88, %s89
      %p101 = scmp.eq.s32.totalorder %s32, 1
      %p102 = por %p100, %p101
      %p104 = scmp.ne.s32.totalorder %s89, %s103
      %p105 = scmp.eq.s32.totalorder %s32, 0
      %p106 = por %p104, %p105
      %s108 = sadd.s32 %s107, 1
      %p111 = scmp.eq.s32.totalorder %s26, 1
      %p112 = scmp.ne.s32.totalorder %s107, %s109
      %p113 = scmp.eq.s32.totalorder %s26, 0
      %p114 = por %p112, %p113
      %p115 = scmp.ne.s32.totalorder %s107, %s109
      %p116 = scmp.eq.s32.totalorder %s31, 1
      %p117 = por %p115, %p116
      %p118 = scmp.ne.s32.totalorder %s109, %s110
      %p119 = scmp.eq.s32.totalorder %s31, 0
      %p120 = por %p118, %p119
      %p121 = scmp.ne.s32.totalorder %s109, %s110
      %p122 = scmp.eq.s32.totalorder %s32, 1
      %p123 = por %p121, %p122
      %p125 = scmp.ne.s32.totalorder %s110, %s124
      %p126 = scmp.eq.s32.totalorder %s32, 0
      %p127 = por %p125, %p126
      %s129 = sadd.s32 %s128, 1
      %p132 = scmp.eq.s32.totalorder %s26, 1
      %p133 = scmp.ne.s32.totalorder %s128, %s130
      %p134 = scmp.eq.s32.totalorder %s26, 0
      %p135 = por %p133, %p134
      %p136 = scmp.ne.s32.totalorder %s128, %s130
      %p137 = scmp.eq.s32.totalorder %s31, 1
      %p138 = por %p136, %p137
      %p139 = scmp.ne.s32.totalorder %s130, %s131
      %p140 = scmp.eq.s32.totalorder %s31, 0
      %p141 = por %p139, %p140
      %p142 = scmp.ne.s32.totalorder %s130, %s131
      %p143 = scmp.eq.s32.totalorder %s32, 1
      %p144 = por %p142, %p143
      %p146 = scmp.ne.s32.totalorder %s131, %s145
      %p147 = scmp.eq.s32.totalorder %s32, 0
      %p148 = por %p146, %p147
      %s150 = sadd.s32 %s149, 1
      %p153 = scmp.eq.s32.totalorder %s26, 1
      %p154 = scmp.ne.s32.totalorder %s149, %s151
      %p155 = scmp.eq.s32.totalorder %s26, 0
      %p156 = por %p154, %p155
      %p157 = scmp.ne.s32.totalorder %s149, %s151
      %p158 = scmp.eq.s32.totalorder %s31, 1
      %p159 = por %p157, %p158
      %p160 = scmp.ne.s32.totalorder %s151, %s152
      %p161 = scmp.eq.s32.totalorder %s31, 0
      %p162 = por %p160, %p161
      %p163 = scmp.ne.s32.totalorder %s151, %s152
      %p164 = scmp.eq.s32.totalorder %s32, 1
      %p165 = por %p163, %p164
      %p167 = scmp.ne.s32.totalorder %s152, %s166
      %p168 = scmp.eq.s32.totalorder %s32, 0
      %p169 = por %p167, %p168
      %s171 = sadd.s32 %s170, 1
      %p174 = scmp.eq.s32.totalorder %s26, 1
      %p175 = scmp.ne.s32.totalorder %s170, %s172
      %p176 = scmp.eq.s32.totalorder %s26, 0
      %p177 = por %p175, %p176
      %p178 = scmp.ne.s32.totalorder %s170, %s172
      %p179 = scmp.eq.s32.totalorder %s31, 1
      %p180 = por %p178, %p179
      %p181 = scmp.ne.s32.totalorder %s172, %s173
      %p182 = scmp.eq.s32.totalorder %s31, 0
      %p183 = por %p181, %p182
      %p184 = scmp.ne.s32.totalorder %s172, %s173
      %p185 = scmp.eq.s32.totalorder %s32, 1
      %p186 = por %p184, %p185
      %p188 = scmp.ne.s32.totalorder %s173, %s187
      %p189 = scmp.eq.s32.totalorder %s32, 0
      %p190 = por %p188, %p189
      %s192 = sadd.s32 %s191, 1
      %p195 = scmp.eq.s32.totalorder %s26, 1
      %p196 = scmp.ne.s32.totalorder %s191, %s193
      %p197 = scmp.eq.s32.totalorder %s26, 0
      %p198 = por %p196, %p197
      %p199 = scmp.ne.s32.totalorder %s191, %s193
      %p200 = scmp.eq.s32.totalorder %s31, 1
      %p201 = por %p199, %p200
      %p202 = scmp.ne.s32.totalorder %s193, %s194
      %p203 = scmp.eq.s32.totalorder %s31, 0
      %p204 = por %p202, %p203
      %p205 = scmp.ne.s32.totalorder %s193, %s194
      %p206 = scmp.eq.s32.totalorder %s32, 1
      %p207 = por %p205, %p206
      %p209 = scmp.ne.s32.totalorder %s194, %s208
      %p210 = scmp.eq.s32.totalorder %s32, 0
      %p211 = por %p209, %p210
      %s213 = sadd.s32 %s212, 1
      %p216 = scmp.eq.s32.totalorder %s26, 1
      %p217 = scmp.ne.s32.totalorder %s212, %s214
      %p218 = scmp.eq.s32.totalorder %s26, 0
      %p219 = por %p217, %p218
      %p220 = scmp.ne.s32.totalorder %s212, %s214
      %p221 = scmp.eq.s32.totalorder %s31, 1
      %p222 = por %p220, %p221
      %p223 = scmp.ne.s32.totalorder %s214, %s215
      %p224 = scmp.eq.s32.totalorder %s31, 0
      %p225 = por %p223, %p224
      %p226 = scmp.ne.s32.totalorder %s214, %s215
      %p227 = scmp.eq.s32.totalorder %s32, 1
      %p228 = por %p226, %p227
      %p230 = scmp.ne.s32.totalorder %s215, %s229
      %p231 = scmp.eq.s32.totalorder %s32, 0
      %p232 = por %p230, %p231
      %s234 = sadd.s32 %s233, 1
      %p237 = scmp.eq.s32.totalorder %s26, 1
      %p238 = scmp.ne.s32.totalorder %s233, %s235
      %p239 = scmp.eq.s32.totalorder %s26, 0
      %p240 = por %p238, %p239
      %p241 = scmp.ne.s32.totalorder %s233, %s235
      %p242 = scmp.eq.s32.totalorder %s31, 1
      %p243 = por %p241, %p242
      %p244 = scmp.ne.s32.totalorder %s235, %s236
      %p245 = scmp.eq.s32.totalorder %s31, 0
      %p246 = por %p244, %p245
      %p247 = scmp.ne.s32.totalorder %s235, %s236
      %p248 = scmp.eq.s32.totalorder %s32, 1
      %p249 = por %p247, %p248
      %p251 = scmp.ne.s32.totalorder %s236, %s250
      %p252 = scmp.eq.s32.totalorder %s32, 0
      %p253 = por %p251, %p252
      %s254 = ssub.s32 %s26, %s33
      %p255 = scmp.eq.s32.totalorder %s254, 0
      %s257 = sadd.s32 %s256, 1
      %s258 = scalar_select %p255, %s256, %s257
      %p261 = pneg %p255
      %p262 = scmp.eq.s32.totalorder %s26, 1
      %p263 = por %p261, %p262
      %p264 = scmp.ne.s32.totalorder %s256, %s259
      %p265 = scmp.eq.s32.totalorder %s26, 0
      %p266 = por %p264, %p265
      %p267 = scmp.ne.s32.totalorder %s256, %s259
      %p268 = scmp.eq.s32.totalorder %s31, 1
      %p269 = por %p267, %p268
      %p270 = scmp.ne.s32.totalorder %s259, %s260
      %p271 = scmp.eq.s32.totalorder %s31, 0
      %p272 = por %p270, %p271
      %p273 = scmp.ne.s32.totalorder %s259, %s260
      %p274 = scmp.eq.s32.totalorder %s32, 1
      %p275 = por %p273, %p274
      %p277 = scmp.ne.s32.totalorder %s260, %s276
      %p278 = scmp.eq.s32.totalorder %s32, 0
      %p279 = por %p277, %p278
      %s280 = ssub.s32 %s26, %s33
      %p281 = scmp.eq.s32.totalorder %s280, 0
      %s283 = sadd.s32 %s282, 1
      %s284 = scalar_select %p281, %s282, %s283
      %p287 = pneg %p281
      %p288 = scmp.eq.s32.totalorder %s26, 1
      %p289 = por %p287, %p288
      %p290 = scmp.ne.s32.totalorder %s282, %s285
      %p291 = scmp.eq.s32.totalorder %s26, 0
      %p292 = por %p290, %p291
      %p293 = scmp.ne.s32.totalorder %s282, %s285
      %p294 = scmp.eq.s32.totalorder %s31, 1
      %p295 = por %p293, %p294
      %p296 = scmp.ne.s32.totalorder %s285, %s286
      %p297 = scmp.eq.s32.totalorder %s31, 0
      %p298 = por %p296, %p297
      %p299 = scmp.ne.s32.totalorder %s285, %s286
      %p300 = scmp.eq.s32.totalorder %s32, 1
      %p301 = por %p299, %p300
      %p303 = scmp.ne.s32.totalorder %s286, %s302
      %p304 = scmp.eq.s32.totalorder %s32, 0
      %p305 = por %p303, %p304
      %p306 = scmp.le.s32.totalorder 1, %s26
      %p307 = scmp.lt.s32.totalorder %s26, 3
      %p308 = pnand %p306, %p307
      %p309 = pneg %p308
      // Predicated region
      $region9: #{tpu_custom_call.1} parent=5 // pred_check
        _
      $region10: #{tpu_custom_call.1} parent=5 // pred_check_branch
        %311 = sbr.rel (%p308) target = $region12
      $region11: #{tpu_custom_call.1} parent=5 // pred_region
        %s312 = ssub.s32 %s26, 1
        // Predicated region
        $region13: #{tpu_custom_call.1} parent=11 // pred_check
          %p313 = pneg %p99
        $region14: #{tpu_custom_call.1} parent=11 // pred_check_branch
          %315 = sbr.rel (%p313) target = $region16
        $region15: #{tpu_custom_call.1} parent=11 // pred_region
          %s317 = ssub.s32 2048, 2048
          %318 = vsyncadd [#allocation3], %s317
          %s319 = sshll.u32 [#allocation2], 4
          %s320 = int_to_ptr.vmem [resolvable:$true] %s319
          %325 = dma.hbm_to_vmem [thread:$0]  %s2, 2048, %s320, [#allocation3], 64, 64, 4
        $region16: #{tpu_custom_call.1} parent=11 // pred_fallthru
          _
        // Predicated region
        $region17: #{tpu_custom_call.1} parent=11 // pred_check
          %p326 = pneg %p120
        $region18: #{tpu_custom_call.1} parent=11 // pred_check_branch
          %328 = sbr.rel (%p326) target = $region20
        $region19: #{tpu_custom_call.1} parent=11 // pred_region
          _
        $region20: #{tpu_custom_call.1} parent=11 // pred_fallthru
          _
        // Predicated region
        $region21: #{tpu_custom_call.1} parent=11 // pred_check
          %p329 = pneg %p141
        $region22: #{tpu_custom_call.1} parent=11 // pred_check_branch
          %331 = sbr.rel (%p329) target = $region24
        $region23: #{tpu_custom_call.1} parent=11 // pred_region
          _
        $region24: #{tpu_custom_call.1} parent=11 // pred_fallthru
          _
        // Predicated region
        $region25: #{tpu_custom_call.1} parent=11 // pred_check
          %p332 = pneg %p162
        $region26: #{tpu_custom_call.1} parent=11 // pred_check_branch
          %334 = sbr.rel (%p332) target = $region28
        $region27: #{tpu_custom_call.1} parent=11 // pred_region
          _
        $region28: #{tpu_custom_call.1} parent=11 // pred_fallthru
          _
        // Predicated region
        $region29: #{tpu_custom_call.1} parent=11 // pred_check
          %p335 = pneg %p183
        $region30: #{tpu_custom_call.1} parent=11 // pred_check_branch
          %337 = sbr.rel (%p335) target = $region32
        $region31: #{tpu_custom_call.1} parent=11 // pred_region
          %s339 = ssub.s32 256, 256
          %340 = vsyncadd [#allocation6], %s339
          %s341 = sshll.u32 [#allocation5], 4
          %s342 = int_to_ptr.vmem [resolvable:$true] %s341
          %347 = dma.hbm_to_vmem [thread:$0]  %s6, 256, %s342, [#allocation6], 64, 64, 4
        $region32: #{tpu_custom_call.1} parent=11 // pred_fallthru
          _
        // Predicated region
        $region33: #{tpu_custom_call.1} parent=11 // pred_check
          %p348 = pneg %p204
        $region34: #{tpu_custom_call.1} parent=11 // pred_check_branch
          %350 = sbr.rel (%p348) target = $region36
        $region35: #{tpu_custom_call.1} parent=11 // pred_region
          _
        $region36: #{tpu_custom_call.1} parent=11 // pred_fallthru
          _
        // Predicated region
        $region37: #{tpu_custom_call.1} parent=11 // pred_check
          %p351 = pneg %p225
        $region38: #{tpu_custom_call.1} parent=11 // pred_check_branch
          %353 = sbr.rel (%p351) target = $region40
        $region39: #{tpu_custom_call.1} parent=11 // pred_region
          %s355 = ssub.s32 2048, 2048
          %356 = vsyncadd [#allocation6], %s355
          %s357 = sshll.u32 [#allocation7], 4
          %s358 = int_to_ptr.vmem [resolvable:$true] %s357
          %363 = dma.hbm_to_vmem [thread:$0]  %s8, 2048, %s358, [#allocation6], 128, 128, 8
        $region40: #{tpu_custom_call.1} parent=11 // pred_fallthru
          _
        // Predicated region
        $region41: #{tpu_custom_call.1} parent=11 // pred_check
          %p364 = pneg %p246
        $region42: #{tpu_custom_call.1} parent=11 // pred_check_branch
          %366 = sbr.rel (%p364) target = $region44
        $region43: #{tpu_custom_call.1} parent=11 // pred_region
          _
        $region44: #{tpu_custom_call.1} parent=11 // pred_fallthru
          _
      $region12: #{tpu_custom_call.1} parent=5 // pred_fallthru
        _
      %p367 = scmp.lt.s32.totalorder %s26, 2
      // Predicated region
      $region45: #{tpu_custom_call.1} parent=5 // pred_check
        %p368 = pneg %p367
      $region46: #{tpu_custom_call.1} parent=5 // pred_check_branch
        %370 = sbr.rel (%p368) target = $region48
      $region47: #{tpu_custom_call.1} parent=5 // pred_region
        // Predicated region
        $region49: #{tpu_custom_call.1} parent=47 // pred_check
          %p371 = pneg %p46
        $region50: #{tpu_custom_call.1} parent=47 // pred_check_branch
          %373 = sbr.rel (%p371) target = $region52
        $region51: #{tpu_custom_call.1} parent=47 // pred_region
          %s374 = smul.u32 16, %s26
          %p375 = scmp.lt.s32.totalorder %s374, 31
          %s376 = scalar_select %p375, %s374, 31
          %s377 = smul.addr %s376, 2
          %s378 = smul.addr %s377, 4
          %s379 = scalar_lea.vmem %s0, %s378
          %s380 = smul.u32 16, %s26
        $region52: #{tpu_custom_call.1} parent=47 // pred_fallthru
          _
        // Predicated region
        $region53: #{tpu_custom_call.1} parent=47 // pred_check
          %p381 = pneg %p72
        $region54: #{tpu_custom_call.1} parent=47 // pred_check_branch
          %383 = sbr.rel (%p381) target = $region56
        $region55: #{tpu_custom_call.1} parent=47 // pred_region
          %s384 = smul.u32 16, %s26
          %p385 = scmp.lt.s32.totalorder %s384, 31
          %s386 = scalar_select %p385, %s384, 31
          %s387 = smul.addr %s386, 8
          %s388 = scalar_lea.vmem %s1, %s387
          %s389 = smul.u32 16, %s26
        $region56: #{tpu_custom_call.1} parent=47 // pred_fallthru
          _
      $region48: #{tpu_custom_call.1} parent=5 // pred_fallthru
        _
      %p390 = scmp.le.s32.totalorder 1, %s26
      %p391 = scmp.lt.s32.totalorder %s26, 3
      %p392 = pnand %p390, %p391
      %p393 = pneg %p392
      // Predicated region
      $region57: #{tpu_custom_call.1} parent=5 // pred_check
        _
      $region58: #{tpu_custom_call.1} parent=5 // pred_check_branch
        %395 = sbr.rel (%p392) target = $region60
      $region59: #{tpu_custom_call.1} parent=5 // pred_region
        %s396 = ssub.s32 %s26, 1
        // Predicated region
        $region61: #{tpu_custom_call.1} parent=59 // pred_check
          %p397 = pneg %p99
        $region62: #{tpu_custom_call.1} parent=59 // pred_check_branch
          %399 = sbr.rel (%p397) target = $region64
        $region63: #{tpu_custom_call.1} parent=59 // pred_region
          %400 = dma.done [#allocation3], 2048
        $region64: #{tpu_custom_call.1} parent=59 // pred_fallthru
          _
        // Predicated region
        $region65: #{tpu_custom_call.1} parent=59 // pred_check
          %p401 = pneg %p183
        $region66: #{tpu_custom_call.1} parent=59 // pred_check_branch
          %403 = sbr.rel (%p401) target = $region68
        $region67: #{tpu_custom_call.1} parent=59 // pred_region
          %404 = dma.done [#allocation6], 256
        $region68: #{tpu_custom_call.1} parent=59 // pred_fallthru
          _
        // Predicated region
        $region69: #{tpu_custom_call.1} parent=59 // pred_check
          %p405 = pneg %p225
        $region70: #{tpu_custom_call.1} parent=59 // pred_check_branch
          %407 = sbr.rel (%p405) target = $region72
        $region71: #{tpu_custom_call.1} parent=59 // pred_region
          %408 = dma.done [#allocation6], 2048
        $region72: #{tpu_custom_call.1} parent=59 // pred_fallthru
          _
        %s409 = smul.u32 16, %s31
        %p410 = scmp.lt.s32.totalorder %s409, 31
        %s411 = scalar_select %p410, %s409, 31
        %s412 = smul.addr %s411, 2
        %s413 = smul.addr %s412, 4
        %s414 = scalar_lea.vmem %s0, %s413
        %p415 = pneg %p52
        %p416 = pneg %p49
        %s417 = smul.u32 16, %s31
        %p418 = scmp.lt.s32.totalorder %s417, 31
        %s419 = scalar_select %p418, %s417, 31
        %s420 = smul.addr %s419, 8
        %s421 = scalar_lea.vmem %s1, %s420
        %p422 = pneg %p78
        %p423 = pneg %p75
        %p424 = pneg %p99
        %p425 = pneg %p96
        %p426 = pneg %p120
        %p427 = pneg %p117
        %p428 = pneg %p141
        %p429 = pneg %p138
        %p430 = pneg %p162
        %p431 = pneg %p159
        %p432 = pneg %p183
        %p433 = pneg %p180
        %p434 = pneg %p204
        %p435 = pneg %p201
        %p436 = pneg %p225
        %p437 = pneg %p222
        %p438 = pneg %p246
        %p439 = pneg %p243
        %p440 = pneg %p272
        %p441 = pneg %p269
        %s442 = sand.u32 %s259, 1
        %s443 = scalar_lea.sflag [#allocation4], %s442
        %s444 = sand.u32 %s259, 1
        %s445 = smul.addr %s444, 256
        %s446 = scalar_lea.vmem [#allocation8], %s445
        %p447 = pneg %p298
        %p448 = pneg %p295
        %s449 = sand.u32 %s285, 1
        %s450 = scalar_lea.sflag [#allocation10], %s449
        %s451 = sand.u32 %s285, 1
        %s452 = smul.addr %s451, 128
        %s453 = scalar_lea.vmem [#allocation9], %s452
        %s454 = smul.u32 16, %s31
        %p455 = scmp.lt.s32.totalorder %s454, 31
        %s456 = scalar_select %p455, %s454, 31
        %s457 = smul.addr %s456, 2
        %s458 = smul.addr %s457, 4
        %s459 = scalar_lea.vmem %s0, %s458
        %s460 = smul.u32 16, %s31
        %s461 = smul.u32 16, %s31
        %p462 = scmp.lt.s32.totalorder %s461, 31
        %s463 = scalar_select %p462, %s461, 31
        %s464 = smul.addr %s463, 8
        %s465 = scalar_lea.vmem %s1, %s464
        %s466 = smul.u32 16, %s31
        %s467 = smul.u32 16, %s31
        %s468 = smul.u32 16, %s31
        %v470 = vld [vmem:[%s459] sm:$0xff]
        %v471 = vld [vmem:[%s459 + $0x8] sm:$0xff]
        %v472 = vld [vmem:[%s459 + $0x10] sm:$0xff]
        %v473 = vld [vmem:[%s459 + $0x18] sm:$0xff]
        %v474 = vld [vmem:[%s459 + $0x20] sm:$0xff]
        %v475 = vld [vmem:[%s459 + $0x28] sm:$0xff]
        %v476 = vld [vmem:[%s459 + $0x30] sm:$0xff]
        %v477 = vld [vmem:[%s459 + $0x38] sm:$0xff]
        %v478 = vld [vmem:[%s459 + $0x40] sm:$0xff]
        %v479 = vld [vmem:[%s459 + $0x48] sm:$0xff]
        %v480 = vld [vmem:[%s459 + $0x50] sm:$0xff]
        %v481 = vld [vmem:[%s459 + $0x58] sm:$0xff]
        %v482 = vld [vmem:[%s459 + $0x60] sm:$0xff]
        %v483 = vld [vmem:[%s459 + $0x68] sm:$0xff]
        %v484 = vld [vmem:[%s459 + $0x70] sm:$0xff]
        %v485 = vld [vmem:[%s459 + $0x78] sm:$0xff]
        %v486 = vld [vmem:[#allocation2] sm:$0xf]
        %v487 = vld [vmem:[#allocation2 + $0x4] sm:$0xf]
        %v488 = vld [vmem:[#allocation2 + $0x8] sm:$0xf]
        %v489 = vld [vmem:[#allocation2 + $0xc] sm:$0xf]
        %v490 = vld [vmem:[#allocation2 + $0x10] sm:$0xf]
        %v491 = vld [vmem:[#allocation2 + $0x14] sm:$0xf]
        %v492 = vld [vmem:[#allocation2 + $0x18] sm:$0xf]
        %v493 = vld [vmem:[#allocation2 + $0x1c] sm:$0xf]
        %v494 = vld [vmem:[#allocation2 + $0x20] sm:$0xf]
        %v495 = vld [vmem:[#allocation2 + $0x24] sm:$0xf]
        %v496 = vld [vmem:[#allocation2 + $0x28] sm:$0xf]
        %v497 = vld [vmem:[#allocation2 + $0x2c] sm:$0xf]
        %v498 = vld [vmem:[#allocation2 + $0x30] sm:$0xf]
        %v499 = vld [vmem:[#allocation2 + $0x34] sm:$0xf]
        %v500 = vld [vmem:[#allocation2 + $0x38] sm:$0xf]
        %v501 = vld [vmem:[#allocation2 + $0x3c] sm:$0xf]
        %v502 = vld [vmem:[#allocation2 + $0x40] sm:$0xf]
        %v503 = vld [vmem:[#allocation2 + $0x44] sm:$0xf]
        %v504 = vld [vmem:[#allocation2 + $0x48] sm:$0xf]
        %v505 = vld [vmem:[#allocation2 + $0x4c] sm:$0xf]
        %v506 = vld [vmem:[#allocation2 + $0x50] sm:$0xf]
        %v507 = vld [vmem:[#allocation2 + $0x54] sm:$0xf]
        %v508 = vld [vmem:[#allocation2 + $0x58] sm:$0xf]
        %v509 = vld [vmem:[#allocation2 + $0x5c] sm:$0xf]
        %v510 = vld [vmem:[#allocation2 + $0x60] sm:$0xf]
        %v511 = vld [vmem:[#allocation2 + $0x64] sm:$0xf]
        %v512 = vld [vmem:[#allocation2 + $0x68] sm:$0xf]
        %v513 = vld [vmem:[#allocation2 + $0x6c] sm:$0xf]
        %v514 = vld [vmem:[#allocation2 + $0x70] sm:$0xf]
        %v515 = vld [vmem:[#allocation2 + $0x74] sm:$0xf]
        %v516 = vld [vmem:[#allocation2 + $0x78] sm:$0xf]
        %v517 = vld [vmem:[#allocation2 + $0x7c] sm:$0xf]
        %v518 = vld [vmem:[%s3] sm:$0x1]
        %v520 = vlaneseq
        %v521 = vshrl.u32 %v520, 7
        %v522 = vsub.s32 0, %v521
        %v523 = vrot.slane %v518, %v522
        %v541 = vunpack.c.l.b16 %v470
        %v542 = vunpack.c.h.b16 %v470
        %v543 = vunpack.c.l.b16 %v471
        %v544 = vunpack.c.h.b16 %v471
        %v545 = vunpack.c.l.b16 %v472
        %v546 = vunpack.c.h.b16 %v472
        %v547 = vunpack.c.l.b16 %v473
        %v548 = vunpack.c.h.b16 %v473
        %v549 = vunpack.c.l.b16 %v474
        %v550 = vunpack.c.h.b16 %v474
        %v551 = vunpack.c.l.b16 %v475
        %v552 = vunpack.c.h.b16 %v475
        %v553 = vunpack.c.l.b16 %v476
        %v554 = vunpack.c.h.b16 %v476
        %v555 = vunpack.c.l.b16 %v477
        %v556 = vunpack.c.h.b16 %v477
        %v557 = vunpack.c.l.b16 %v478
        %v558 = vunpack.c.h.b16 %v478
        %v559 = vunpack.c.l.b16 %v479
        %v560 = vunpack.c.h.b16 %v479
        %v561 = vunpack.c.l.b16 %v480
        %v562 = vunpack.c.h.b16 %v480
        %v563 = vunpack.c.l.b16 %v481
        %v564 = vunpack.c.h.b16 %v481
        %v565 = vunpack.c.l.b16 %v482
        %v566 = vunpack.c.h.b16 %v482
        %v567 = vunpack.c.l.b16 %v483
        %v568 = vunpack.c.h.b16 %v483
        %v569 = vunpack.c.l.b16 %v484
        %v570 = vunpack.c.h.b16 %v484
        %v571 = vunpack.c.l.b16 %v485
        %v572 = vunpack.c.h.b16 %v485
        %v573 = vpack.c.b16 %v543, %v541
        %v574 = vpack.c.b16 %v544, %v542
        %v575 = vpack.c.b16 %v547, %v545
        %v576 = vpack.c.b16 %v548, %v546
        %v577 = vpack.c.b16 %v551, %v549
        %v578 = vpack.c.b16 %v552, %v550
        %v579 = vpack.c.b16 %v555, %v553
        %v580 = vpack.c.b16 %v556, %v554
        %v581 = vpack.c.b16 %v559, %v557
        %v582 = vpack.c.b16 %v560, %v558
        %v583 = vpack.c.b16 %v563, %v561
        %v584 = vpack.c.b16 %v564, %v562
        %v585 = vpack.c.b16 %v567, %v565
        %v586 = vpack.c.b16 %v568, %v566
        %v587 = vpack.c.b16 %v571, %v569
        %v588 = vpack.c.b16 %v572, %v570
        %v637 = vunpack.c.l.b16 %v486
        %v638 = vunpack.c.l.b16 %v487
        %v639 = vunpack.c.l.b16 %v488
        %v640 = vunpack.c.l.b16 %v489
        %v641 = vunpack.c.l.b16 %v490
        %v642 = vunpack.c.l.b16 %v491
        %v643 = vunpack.c.l.b16 %v492
        %v644 = vunpack.c.l.b16 %v493
        %v645 = vunpack.c.l.b16 %v494
        %v646 = vunpack.c.l.b16 %v495
        %v647 = vunpack.c.l.b16 %v496
        %v648 = vunpack.c.l.b16 %v497
        %v649 = vunpack.c.l.b16 %v498
        %v650 = vunpack.c.l.b16 %v499
        %v651 = vunpack.c.l.b16 %v500
        %v652 = vunpack.c.l.b16 %v501
        %v653 = vunpack.c.l.b16 %v502
        %v654 = vunpack.c.l.b16 %v503
        %v655 = vunpack.c.l.b16 %v504
        %v656 = vunpack.c.l.b16 %v505
        %v657 = vunpack.c.l.b16 %v506
        %v658 = vunpack.c.l.b16 %v507
        %v659 = vunpack.c.l.b16 %v508
        %v660 = vunpack.c.l.b16 %v509
        %v661 = vunpack.c.l.b16 %v510
        %v662 = vunpack.c.l.b16 %v511
        %v663 = vunpack.c.l.b16 %v512
        %v664 = vunpack.c.l.b16 %v513
        %v665 = vunpack.c.l.b16 %v514
        %v666 = vunpack.c.l.b16 %v515
        %v667 = vunpack.c.l.b16 %v516
        %v668 = vunpack.c.l.b16 %v517
        %v669 = vpack.c.b16 %v638, %v637
        %v670 = vpack.c.b16 %v640, %v639
        %v671 = vpack.c.b16 %v642, %v641
        %v672 = vpack.c.b16 %v644, %v643
        %v673 = vpack.c.b16 %v646, %v645
        %v674 = vpack.c.b16 %v648, %v647
        %v675 = vpack.c.b16 %v650, %v649
        %v676 = vpack.c.b16 %v652, %v651
        %v677 = vpack.c.b16 %v654, %v653
        %v678 = vpack.c.b16 %v656, %v655
        %v679 = vpack.c.b16 %v658, %v657
        %v680 = vpack.c.b16 %v660, %v659
        %v681 = vpack.c.b16 %v662, %v661
        %v682 = vpack.c.b16 %v664, %v663
        %v683 = vpack.c.b16 %v666, %v665
        %v684 = vpack.c.b16 %v668, %v667
        %701 = vmatprep.subr.bf16.mxu0 0
        %702 = vmatpush1.bf16.msra.mxu0 %v676
        %703 = vmatprep.subr.bf16.mxu0 0
        %704 = vmatpush1.bf16.msra.mxu0 %v675
        %705 = vmatprep.subr.bf16.mxu0 0
        %706 = vmatpush1.bf16.msra.mxu0 %v674
        %707 = vmatprep.subr.bf16.mxu0 0
        %708 = vmatpush1.bf16.msra.mxu0 %v673
        %709 = vmatprep.subr.bf16.mxu0 0
        %710 = vmatpush1.bf16.msra.mxu0 %v672
        %711 = vmatprep.subr.bf16.mxu0 0
        %712 = vmatpush1.bf16.msra.mxu0 %v671
        %713 = vmatprep.subr.bf16.mxu0 0
        %714 = vmatpush1.bf16.msra.mxu0 %v670
        %715 = vmatprep.subr.bf16.mxu0 0
        %716 = vmatpush1.bf16.msra.mxu0 %v669
        %717 = vmatprep.subr.bf16.mxu0 0
        %718 = vmatpush2.bf16.msra.mxu0 %v684
        %719 = vmatprep.subr.bf16.mxu0 0
        %720 = vmatpush2.bf16.msra.mxu0 %v683
        %721 = vmatprep.subr.bf16.mxu0 0
        %722 = vmatpush2.bf16.msra.mxu0 %v682
        %723 = vmatprep.subr.bf16.mxu0 0
        %724 = vmatpush2.bf16.msra.mxu0 %v681
        %725 = vmatprep.subr.bf16.mxu0 0
        %726 = vmatpush2.bf16.msra.mxu0 %v680
        %727 = vmatprep.subr.bf16.mxu0 0
        %728 = vmatpush2.bf16.msra.mxu0 %v679
        %729 = vmatprep.subr.bf16.mxu0 0
        %730 = vmatpush2.bf16.msra.mxu0 %v678
        %731 = vmatprep.subr.bf16.mxu0 0
        %732 = vmatpush2.bf16.msra.mxu0 %v677
        %733 = vmatprep.mubr.bf16.mxu0 %v574
        %734 = vmatmul.mubr.bf16.gmra.mxu0 %v573
        %v735 = vpop.f32.mrf.mxu0
        %v736 = vadd.f32 %v523, %v735
        %v737 = vpop.f32.mrf.mxu0
        %v738 = vpop.f32.mrf.mxu0
        %v739 = vadd.f32 %v523, %v738
        %v740 = vpop.f32.mrf.mxu0
        %741 = vmatprep.mubr.bf16.mxu0 %v576
        %742 = vmatmul.mubr.bf16.gmra.mxu0 %v575
        %v743 = vpop.f32.mrf.mxu0
        %v744 = vadd.f32 %v523, %v743
        %v745 = vpop.f32.mrf.mxu0
        %v746 = vpop.f32.mrf.mxu0
        %v747 = vadd.f32 %v523, %v746
        %v748 = vpop.f32.mrf.mxu0
        %749 = vmatprep.mubr.bf16.mxu0 %v578
        %750 = vmatmul.mubr.bf16.gmra.mxu0 %v577
        %v751 = vpop.f32.mrf.mxu0
        %v752 = vadd.f32 %v523, %v751
        %v753 = vpop.f32.mrf.mxu0
        %v754 = vpop.f32.mrf.mxu0
        %v755 = vadd.f32 %v523, %v754
        %v756 = vpop.f32.mrf.mxu0
        %757 = vmatprep.mubr.bf16.mxu0 %v580
        %758 = vmatmul.mubr.bf16.gmra.mxu0 %v579
        %v759 = vpop.f32.mrf.mxu0
        %v760 = vadd.f32 %v523, %v759
        %v761 = vpop.f32.mrf.mxu0
        %v762 = vpop.f32.mrf.mxu0
        %v763 = vadd.f32 %v523, %v762
        %v764 = vpop.f32.mrf.mxu0
        %765 = vmatprep.mubr.bf16.mxu0 %v582
        %766 = vmatmul.mubr.bf16.gmra.mxu0 %v581
        %v767 = vpop.f32.mrf.mxu0
        %v768 = vadd.f32 %v523, %v767
        %v769 = vpop.f32.mrf.mxu0
        %v770 = vpop.f32.mrf.mxu0
        %v771 = vadd.f32 %v523, %v770
        %v772 = vpop.f32.mrf.mxu0
        %773 = vmatprep.mubr.bf16.mxu0 %v584
        %774 = vmatmul.mubr.bf16.gmra.mxu0 %v583
        %v775 = vpop.f32.mrf.mxu0
        %v776 = vadd.f32 %v523, %v775
        %v777 = vpop.f32.mrf.mxu0
        %v778 = vpop.f32.mrf.mxu0
        %v779 = vadd.f32 %v523, %v778
        %v780 = vpop.f32.mrf.mxu0
        %781 = vmatprep.mubr.bf16.mxu0 %v586
        %782 = vmatmul.mubr.bf16.gmra.mxu0 %v585
        %v783 = vpop.f32.mrf.mxu0
        %v784 = vadd.f32 %v523, %v783
        %v785 = vpop.f32.mrf.mxu0
        %v786 = vpop.f32.mrf.mxu0
        %v787 = vadd.f32 %v523, %v786
        %v788 = vpop.f32.mrf.mxu0
        %789 = vmatprep.mubr.bf16.mxu0 %v588
        %790 = vmatmul.mubr.bf16.gmra.mxu0 %v587
        %v791 = vpop.f32.mrf.mxu0
        %v792 = vadd.f32 %v523, %v791
        %v793 = vpop.f32.mrf.mxu0
        %v794 = vpop.f32.mrf.mxu0
        %v795 = vadd.f32 %v523, %v794
        %v796 = vpop.f32.mrf.mxu0
        %797 = vdwg.mxu0
        %v798 = vmax.f32 %v736, 0.0
        %v799 = vmax.f32 %v739, 0.0
        %v800 = vmax.f32 %v744, 0.0
        %v801 = vmax.f32 %v747, 0.0
        %v802 = vmax.f32 %v752, 0.0
        %v803 = vmax.f32 %v755, 0.0
        %v804 = vmax.f32 %v760, 0.0
        %v805 = vmax.f32 %v763, 0.0
        %v806 = vmax.f32 %v768, 0.0
        %v807 = vmax.f32 %v771, 0.0
        %v808 = vmax.f32 %v776, 0.0
        %v809 = vmax.f32 %v779, 0.0
        %v810 = vmax.f32 %v784, 0.0
        %v811 = vmax.f32 %v787, 0.0
        %v812 = vmax.f32 %v792, 0.0
        %v813 = vmax.f32 %v795, 0.0
        %v814 = vpack.c.bf16 %v799, %v798
        %v815 = vpack.c.bf16 %v801, %v800
        %v816 = vpack.c.bf16 %v803, %v802
        %v817 = vpack.c.bf16 %v805, %v804
        %v818 = vpack.c.bf16 %v807, %v806
        %v819 = vpack.c.bf16 %v809, %v808
        %v820 = vpack.c.bf16 %v811, %v810
        %v821 = vpack.c.bf16 %v813, %v812
        %v822 = vld [vmem:[%s4] sm:$0xf]
        %v823 = vld [vmem:[%s4 + $0x4] sm:$0xf]
        %v824 = vld [vmem:[%s4 + $0x8] sm:$0xf]
        %v825 = vld [vmem:[%s4 + $0xc] sm:$0xf]
        %v826 = vld [vmem:[%s4 + $0x10] sm:$0xf]
        %v827 = vld [vmem:[%s4 + $0x14] sm:$0xf]
        %v828 = vld [vmem:[%s4 + $0x18] sm:$0xf]
        %v829 = vld [vmem:[%s4 + $0x1c] sm:$0xf]
        %v830 = vld [vmem:[%s4 + $0x20] sm:$0xf]
        %v831 = vld [vmem:[%s4 + $0x24] sm:$0xf]
        %v832 = vld [vmem:[%s4 + $0x28] sm:$0xf]
        %v833 = vld [vmem:[%s4 + $0x2c] sm:$0xf]
        %v834 = vld [vmem:[%s4 + $0x30] sm:$0xf]
        %v835 = vld [vmem:[%s4 + $0x34] sm:$0xf]
        %v836 = vld [vmem:[%s4 + $0x38] sm:$0xf]
        %v837 = vld [vmem:[%s4 + $0x3c] sm:$0xf]
        %v838 = vld [vmem:[%s5] sm:$0x1]
        %v840 = vlaneseq
        %v841 = vshrl.u32 %v840, 7
        %v842 = vsub.s32 0, %v841
        %v843 = vrot.slane %v838, %v842
        %v861 = vunpack.c.l.b16 %v822
        %v862 = vunpack.c.l.b16 %v823
        %v863 = vunpack.c.l.b16 %v824
        %v864 = vunpack.c.l.b16 %v825
        %v865 = vunpack.c.l.b16 %v826
        %v866 = vunpack.c.l.b16 %v827
        %v867 = vunpack.c.l.b16 %v828
        %v868 = vunpack.c.l.b16 %v829
        %v869 = vunpack.c.l.b16 %v830
        %v870 = vunpack.c.l.b16 %v831
        %v871 = vunpack.c.l.b16 %v832
        %v872 = vunpack.c.l.b16 %v833
        %v873 = vunpack.c.l.b16 %v834
        %v874 = vunpack.c.l.b16 %v835
        %v875 = vunpack.c.l.b16 %v836
        %v876 = vunpack.c.l.b16 %v837
        %v877 = vpack.c.b16 %v862, %v861
        %v878 = vpack.c.b16 %v864, %v863
        %v879 = vpack.c.b16 %v866, %v865
        %v880 = vpack.c.b16 %v868, %v867
        %v881 = vpack.c.b16 %v870, %v869
        %v882 = vpack.c.b16 %v872, %v871
        %v883 = vpack.c.b16 %v874, %v873
        %v884 = vpack.c.b16 %v876, %v875
        %893 = vmatprep.subr.bf16.mxu0 0
        %894 = vmatpush1.bf16.msra.mxu0 %v884
        %895 = vmatprep.subr.bf16.mxu0 0
        %896 = vmatpush1.bf16.msra.mxu0 %v883
        %897 = vmatprep.subr.bf16.mxu0 0
        %898 = vmatpush1.bf16.msra.mxu0 %v882
        %899 = vmatprep.subr.bf16.mxu0 0
        %900 = vmatpush1.bf16.msra.mxu0 %v881
        %901 = vmatprep.subr.bf16.mxu0 0
        %902 = vmatpush1.bf16.msra.mxu0 %v880
        %903 = vmatprep.subr.bf16.mxu0 0
        %904 = vmatpush1.bf16.msra.mxu0 %v879
        %905 = vmatprep.subr.bf16.mxu0 0
        %906 = vmatpush1.bf16.msra.mxu0 %v878
        %907 = vmatprep.subr.bf16.mxu0 0
        %908 = vmatpush1.bf16.msra.mxu0 %v877
        %909 = vmatprep.subr.bf16.mxu0 0
        %910 = vmatpush2.bf16.msra.mxu0 0
        %911 = vmatprep.subr.bf16.mxu0 0
        %912 = vmatpush2.bf16.msra.mxu0 0
        %913 = vmatprep.subr.bf16.mxu0 0
        %914 = vmatpush2.bf16.msra.mxu0 0
        %915 = vmatprep.subr.bf16.mxu0 0
        %916 = vmatpush2.bf16.msra.mxu0 0
        %917 = vmatprep.subr.bf16.mxu0 0
        %918 = vmatpush2.bf16.msra.mxu0 0
        %919 = vmatprep.subr.bf16.mxu0 0
        %920 = vmatpush2.bf16.msra.mxu0 0
        %921 = vmatprep.subr.bf16.mxu0 0
        %922 = vmatpush2.bf16.msra.mxu0 0
        %923 = vmatprep.subr.bf16.mxu0 0
        %924 = vmatpush2.bf16.msra.mxu0 0
        %925 = vmatprep.mubr.bf16.mxu0 0
        %926 = vmatmul.mubr.bf16.gmra.mxu0 %v814
        %v927 = vpop.f32.mrf.mxu0
        %v928 = vadd.f32 %v843, %v927
        %v929 = vpop.f32.mrf.mxu0
        %v930 = vpop.f32.mrf.mxu0
        %v931 = vadd.f32 %v843, %v930
        %v932 = vpop.f32.mrf.mxu0
        %933 = vmatprep.mubr.bf16.mxu0 0
        %934 = vmatmul.mubr.bf16.gmra.mxu0 %v815
        %v935 = vpop.f32.mrf.mxu0
        %v936 = vadd.f32 %v843, %v935
        %v937 = vpop.f32.mrf.mxu0
        %v938 = vpop.f32.mrf.mxu0
        %v939 = vadd.f32 %v843, %v938
        %v940 = vpop.f32.mrf.mxu0
        %941 = vmatprep.mubr.bf16.mxu0 0
        %942 = vmatmul.mubr.bf16.gmra.mxu0 %v816
        %v943 = vpop.f32.mrf.mxu0
        %v944 = vadd.f32 %v843, %v943
        %v945 = vpop.f32.mrf.mxu0
        %v946 = vpop.f32.mrf.mxu0
        %v947 = vadd.f32 %v843, %v946
        %v948 = vpop.f32.mrf.mxu0
        %949 = vmatprep.mubr.bf16.mxu0 0
        %950 = vmatmul.mubr.bf16.gmra.mxu0 %v817
        %v951 = vpop.f32.mrf.mxu0
        %v952 = vadd.f32 %v843, %v951
        %v953 = vpop.f32.mrf.mxu0
        %v954 = vpop.f32.mrf.mxu0
        %v955 = vadd.f32 %v843, %v954
        %v956 = vpop.f32.mrf.mxu0
        %957 = vmatprep.mubr.bf16.mxu0 0
        %958 = vmatmul.mubr.bf16.gmra.mxu0 %v818
        %v959 = vpop.f32.mrf.mxu0
        %v960 = vadd.f32 %v843, %v959
        %v961 = vpop.f32.mrf.mxu0
        %v962 = vpop.f32.mrf.mxu0
        %v963 = vadd.f32 %v843, %v962
        %v964 = vpop.f32.mrf.mxu0
        %965 = vmatprep.mubr.bf16.mxu0 0
        %966 = vmatmul.mubr.bf16.gmra.mxu0 %v819
        %v967 = vpop.f32.mrf.mxu0
        %v968 = vadd.f32 %v843, %v967
        %v969 = vpop.f32.mrf.mxu0
        %v970 = vpop.f32.mrf.mxu0
        %v971 = vadd.f32 %v843, %v970
        %v972 = vpop.f32.mrf.mxu0
        %973 = vmatprep.mubr.bf16.mxu0 0
        %974 = vmatmul.mubr.bf16.gmra.mxu0 %v820
        %v975 = vpop.f32.mrf.mxu0
        %v976 = vadd.f32 %v843, %v975
        %v977 = vpop.f32.mrf.mxu0
        %v978 = vpop.f32.mrf.mxu0
        %v979 = vadd.f32 %v843, %v978
        %v980 = vpop.f32.mrf.mxu0
        %981 = vmatprep.mubr.bf16.mxu0 0
        %982 = vmatmul.mubr.bf16.gmra.mxu0 %v821
        %v983 = vpop.f32.mrf.mxu0
        %v984 = vadd.f32 %v843, %v983
        %v985 = vpop.f32.mrf.mxu0
        %v986 = vpop.f32.mrf.mxu0
        %v987 = vadd.f32 %v843, %v986
        %v988 = vpop.f32.mrf.mxu0
        %989 = vdwg.mxu0
        %990 = vst [vmem:[%s453] sm:$0xff] %v928
        %991 = vst [vmem:[%s453 + $0x8] sm:$0xff] %v931
        %992 = vst [vmem:[%s453 + $0x10] sm:$0xff] %v936
        %993 = vst [vmem:[%s453 + $0x18] sm:$0xff] %v939
        %994 = vst [vmem:[%s453 + $0x20] sm:$0xff] %v944
        %995 = vst [vmem:[%s453 + $0x28] sm:$0xff] %v947
        %996 = vst [vmem:[%s453 + $0x30] sm:$0xff] %v952
        %997 = vst [vmem:[%s453 + $0x38] sm:$0xff] %v955
        %998 = vst [vmem:[%s453 + $0x40] sm:$0xff] %v960
        %999 = vst [vmem:[%s453 + $0x48] sm:$0xff] %v963
        %1000 = vst [vmem:[%s453 + $0x50] sm:$0xff] %v968
        %1001 = vst [vmem:[%s453 + $0x58] sm:$0xff] %v971
        %1002 = vst [vmem:[%s453 + $0x60] sm:$0xff] %v976
        %1003 = vst [vmem:[%s453 + $0x68] sm:$0xff] %v979
        %1004 = vst [vmem:[%s453 + $0x70] sm:$0xff] %v984
        %1005 = vst [vmem:[%s453 + $0x78] sm:$0xff] %v987
        %v1006 = vld [vmem:[%s465] sm:$0xff]
        %v1007 = vld [vmem:[%s465 + $0x8] sm:$0xff]
        %v1008 = vld [vmem:[%s465 + $0x10] sm:$0xff]
        %v1009 = vld [vmem:[%s465 + $0x18] sm:$0xff]
        %v1010 = vld [vmem:[%s465 + $0x20] sm:$0xff]
        %v1011 = vld [vmem:[%s465 + $0x28] sm:$0xff]
        %v1012 = vld [vmem:[%s465 + $0x30] sm:$0xff]
        %v1013 = vld [vmem:[%s465 + $0x38] sm:$0xff]
        %v1014 = vld [vmem:[%s465 + $0x40] sm:$0xff]
        %v1015 = vld [vmem:[%s465 + $0x48] sm:$0xff]
        %v1016 = vld [vmem:[%s465 + $0x50] sm:$0xff]
        %v1017 = vld [vmem:[%s465 + $0x58] sm:$0xff]
        %v1018 = vld [vmem:[%s465 + $0x60] sm:$0xff]
        %v1019 = vld [vmem:[%s465 + $0x68] sm:$0xff]
        %v1020 = vld [vmem:[%s465 + $0x70] sm:$0xff]
        %v1021 = vld [vmem:[%s465 + $0x78] sm:$0xff]
        %v1022 = vmul.f32 %v928, 0.5
        %v1023 = vmul.f32 %v931, 0.5
        %v1024 = vmul.f32 %v936, 0.5
        %v1025 = vmul.f32 %v939, 0.5
        %v1026 = vmul.f32 %v944, 0.5
        %v1027 = vmul.f32 %v947, 0.5
        %v1028 = vmul.f32 %v952, 0.5
        %v1029 = vmul.f32 %v955, 0.5
        %v1030 = vmul.f32 %v960, 0.5
        %v1031 = vmul.f32 %v963, 0.5
        %v1032 = vmul.f32 %v968, 0.5
        %v1033 = vmul.f32 %v971, 0.5
        %v1034 = vmul.f32 %v976, 0.5
        %v1035 = vmul.f32 %v979, 0.5
        %v1036 = vmul.f32 %v984, 0.5
        %v1037 = vmul.f32 %v987, 0.5
        %v1038 = vmul.f32 %v1022, 1.442695
        %v1039 = vpow.pop %v1038
        %v1040 = vmul.f32 %v1023, 1.442695
        %v1041 = vpow.pop %v1040
        %v1042 = vmul.f32 %v1024, 1.442695
        %v1043 = vpow.pop %v1042
        %v1044 = vmul.f32 %v1025, 1.442695
        %v1045 = vpow.pop %v1044
        %v1046 = vmul.f32 %v1026, 1.442695
        %v1047 = vpow.pop %v1046
        %v1048 = vmul.f32 %v1027, 1.442695
        %v1049 = vpow.pop %v1048
        %v1050 = vmul.f32 %v1028, 1.442695
        %v1051 = vpow.pop %v1050
        %v1052 = vmul.f32 %v1029, 1.442695
        %v1053 = vpow.pop %v1052
        %v1054 = vmul.f32 %v1030, 1.442695
        %v1055 = vpow.pop %v1054
        %v1056 = vmul.f32 %v1031, 1.442695
        %v1057 = vpow.pop %v1056
        %v1058 = vmul.f32 %v1032, 1.442695
        %v1059 = vpow.pop %v1058
        %v1060 = vmul.f32 %v1033, 1.442695
        %v1061 = vpow.pop %v1060
        %v1062 = vmul.f32 %v1034, 1.442695
        %v1063 = vpow.pop %v1062
        %v1064 = vmul.f32 %v1035, 1.442695
        %v1065 = vpow.pop %v1064
        %v1066 = vmul.f32 %v1036, 1.442695
        %v1067 = vpow.pop %v1066
        %v1068 = vmul.f32 %v1037, 1.442695
        %v1069 = vpow.pop %v1068
        %1086 = vrot.lane.b32.xlu0 %v1039, 96
        %v1087 = vpop.permute.xlu0 %1086
        %1088 = vrot.lane.b32.xlu0 %v1041, 96
        %v1089 = vpop.permute.xlu0 %1088
        %1090 = vrot.lane.b32.xlu0 %v1043, 96
        %v1091 = vpop.permute.xlu0 %1090
        %1092 = vrot.lane.b32.xlu0 %v1045, 96
        %v1093 = vpop.permute.xlu0 %1092
        %1094 = vrot.lane.b32.xlu0 %v1047, 96
        %v1095 = vpop.permute.xlu0 %1094
        %1096 = vrot.lane.b32.xlu0 %v1049, 96
        %v1097 = vpop.permute.xlu0 %1096
        %1098 = vrot.lane.b32.xlu0 %v1051, 96
        %v1099 = vpop.permute.xlu0 %1098
        %1100 = vrot.lane.b32.xlu0 %v1053, 96
        %v1101 = vpop.permute.xlu0 %1100
        %1102 = vrot.lane.b32.xlu0 %v1055, 96
        %v1103 = vpop.permute.xlu0 %1102
        %1104 = vrot.lane.b32.xlu0 %v1057, 96
        %v1105 = vpop.permute.xlu0 %1104
        %1106 = vrot.lane.b32.xlu0 %v1059, 96
        %v1107 = vpop.permute.xlu0 %1106
        %1108 = vrot.lane.b32.xlu0 %v1061, 96
        %v1109 = vpop.permute.xlu0 %1108
        %1110 = vrot.lane.b32.xlu0 %v1063, 96
        %v1111 = vpop.permute.xlu0 %1110
        %1112 = vrot.lane.b32.xlu0 %v1065, 96
        %v1113 = vpop.permute.xlu0 %1112
        %1114 = vrot.lane.b32.xlu0 %v1067, 96
        %v1115 = vpop.permute.xlu0 %1114
        %1116 = vrot.lane.b32.xlu0 %v1069, 96
        %v1117 = vpop.permute.xlu0 %1116
        %v1134 = vmul.f32 %v1006, %v1087
        %v1135 = vmul.f32 %v1007, %v1089
        %v1136 = vmul.f32 %v1008, %v1091
        %v1137 = vmul.f32 %v1009, %v1093
        %v1138 = vmul.f32 %v1010, %v1095
        %v1139 = vmul.f32 %v1011, %v1097
        %v1140 = vmul.f32 %v1012, %v1099
        %v1141 = vmul.f32 %v1013, %v1101
        %v1142 = vmul.f32 %v1014, %v1103
        %v1143 = vmul.f32 %v1015, %v1105
        %v1144 = vmul.f32 %v1016, %v1107
        %v1145 = vmul.f32 %v1017, %v1109
        %v1146 = vmul.f32 %v1018, %v1111
        %v1147 = vmul.f32 %v1019, %v1113
        %v1148 = vmul.f32 %v1020, %v1115
        %v1149 = vmul.f32 %v1021, %v1117
        %v1150 = vadd.f32 %v928, %v1134
        %v1151 = vadd.f32 %v931, %v1135
        %v1152 = vadd.f32 %v936, %v1136
        %v1153 = vadd.f32 %v939, %v1137
        %v1154 = vadd.f32 %v944, %v1138
        %v1155 = vadd.f32 %v947, %v1139
        %v1156 = vadd.f32 %v952, %v1140
        %v1157 = vadd.f32 %v955, %v1141
        %v1158 = vadd.f32 %v960, %v1142
        %v1159 = vadd.f32 %v963, %v1143
        %v1160 = vadd.f32 %v968, %v1144
        %v1161 = vadd.f32 %v971, %v1145
        %v1162 = vadd.f32 %v976, %v1146
        %v1163 = vadd.f32 %v979, %v1147
        %v1164 = vadd.f32 %v984, %v1148
        %v1165 = vadd.f32 %v987, %v1149
        %v1166 = vpack.c.bf16 %v1151, %v1150
        %v1167 = vpack.c.bf16 %v1153, %v1152
        %v1168 = vpack.c.bf16 %v1155, %v1154
        %v1169 = vpack.c.bf16 %v1157, %v1156
        %v1170 = vpack.c.bf16 %v1159, %v1158
        %v1171 = vpack.c.bf16 %v1161, %v1160
        %v1172 = vpack.c.bf16 %v1163, %v1162
        %v1173 = vpack.c.bf16 %v1165, %v1164
        %v1174 = vld [vmem:[#allocation5] sm:$0xf]
        %v1175 = vld [vmem:[#allocation5 + $0x4] sm:$0xf]
        %v1176 = vld [vmem:[#allocation5 + $0x8] sm:$0xf]
        %v1177 = vld [vmem:[#allocation5 + $0xc] sm:$0xf]
        %v1178 = vld [vmem:[%s7] sm:$0x1]
        %v1180 = vlaneseq
        %v1181 = vshrl.u32 %v1180, 7
        %v1182 = vsub.s32 0, %v1181
        %v1183 = vrot.slane %v1178, %v1182
        %v1189 = vunpack.c.l.b16 %v1174
        %v1190 = vunpack.c.l.b16 %v1175
        %v1191 = vunpack.c.l.b16 %v1176
        %v1192 = vunpack.c.l.b16 %v1177
        %v1193 = vpack.c.b16 %v1190, %v1189
        %v1194 = vpack.c.b16 %v1192, %v1191
        %vm1197 = vcmask 261120
        %v1199 = vsel %vm1197, %v1166, 0
        %v1202 = vsel %vm1197, %v1167, 0
        %v1205 = vsel %vm1197, %v1168, 0
        %v1208 = vsel %vm1197, %v1169, 0
        %v1211 = vsel %vm1197, %v1170, 0
        %v1214 = vsel %vm1197, %v1171, 0
        %v1217 = vsel %vm1197, %v1172, 0
        %v1220 = vsel %vm1197, %v1173, 0
        %1222 = vmatprep.subr.bf16.mxu0 0
        %1223 = vmatpush1.bf16.msra.mxu0 0
        %1224 = vmatprep.subr.bf16.mxu0 0
        %1225 = vmatpush1.bf16.msra.mxu0 0
        %1226 = vmatprep.subr.bf16.mxu0 0
        %1227 = vmatpush1.bf16.msra.mxu0 0
        %1228 = vmatprep.subr.bf16.mxu0 0
        %1229 = vmatpush1.bf16.msra.mxu0 0
        %1230 = vmatprep.subr.bf16.mxu0 0
        %1231 = vmatpush1.bf16.msra.mxu0 0
        %1232 = vmatprep.subr.bf16.mxu0 0
        %1233 = vmatpush1.bf16.msra.mxu0 0
        %1234 = vmatprep.subr.bf16.mxu0 0
        %1235 = vmatpush1.bf16.msra.mxu0 %v1194
        %1236 = vmatprep.subr.bf16.mxu0 0
        %1237 = vmatpush1.bf16.msra.mxu0 %v1193
        %1238 = vmatprep.subr.bf16.mxu0 0
        %1239 = vmatpush2.bf16.msra.mxu0 0
        %1240 = vmatprep.subr.bf16.mxu0 0
        %1241 = vmatpush2.bf16.msra.mxu0 0
        %1242 = vmatprep.subr.bf16.mxu0 0
        %1243 = vmatpush2.bf16.msra.mxu0 0
        %1244 = vmatprep.subr.bf16.mxu0 0
        %1245 = vmatpush2.bf16.msra.mxu0 0
        %1246 = vmatprep.subr.bf16.mxu0 0
        %1247 = vmatpush2.bf16.msra.mxu0 0
        %1248 = vmatprep.subr.bf16.mxu0 0
        %1249 = vmatpush2.bf16.msra.mxu0 0
        %1250 = vmatprep.subr.bf16.mxu0 0
        %1251 = vmatpush2.bf16.msra.mxu0 0
        %1252 = vmatprep.subr.bf16.mxu0 0
        %1253 = vmatpush2.bf16.msra.mxu0 0
        %1254 = vmatprep.mubr.bf16.mxu0 0
        %1255 = vmatmul.mubr.bf16.gmra.mxu0 %v1199
        %v1256 = vpop.f32.mrf.mxu0
        %v1257 = vadd.f32 %v1183, %v1256
        %v1258 = vpop.f32.mrf.mxu0
        %v1259 = vpop.f32.mrf.mxu0
        %v1260 = vadd.f32 %v1183, %v1259
        %v1261 = vpop.f32.mrf.mxu0
        %1262 = vmatprep.mubr.bf16.mxu0 0
        %1263 = vmatmul.mubr.bf16.gmra.mxu0 %v1202
        %v1264 = vpop.f32.mrf.mxu0
        %v1265 = vadd.f32 %v1183, %v1264
        %v1266 = vpop.f32.mrf.mxu0
        %v1267 = vpop.f32.mrf.mxu0
        %v1268 = vadd.f32 %v1183, %v1267
        %v1269 = vpop.f32.mrf.mxu0
        %1270 = vmatprep.mubr.bf16.mxu0 0
        %1271 = vmatmul.mubr.bf16.gmra.mxu0 %v1205
        %v1272 = vpop.f32.mrf.mxu0
        %v1273 = vadd.f32 %v1183, %v1272
        %v1274 = vpop.f32.mrf.mxu0
        %v1275 = vpop.f32.mrf.mxu0
        %v1276 = vadd.f32 %v1183, %v1275
        %v1277 = vpop.f32.mrf.mxu0
        %1278 = vmatprep.mubr.bf16.mxu0 0
        %1279 = vmatmul.mubr.bf16.gmra.mxu0 %v1208
        %v1280 = vpop.f32.mrf.mxu0
        %v1281 = vadd.f32 %v1183, %v1280
        %v1282 = vpop.f32.mrf.mxu0
        %v1283 = vpop.f32.mrf.mxu0
        %v1284 = vadd.f32 %v1183, %v1283
        %v1285 = vpop.f32.mrf.mxu0
        %1286 = vmatprep.mubr.bf16.mxu0 0
        %1287 = vmatmul.mubr.bf16.gmra.mxu0 %v1211
        %v1288 = vpop.f32.mrf.mxu0
        %v1289 = vadd.f32 %v1183, %v1288
        %v1290 = vpop.f32.mrf.mxu0
        %v1291 = vpop.f32.mrf.mxu0
        %v1292 = vadd.f32 %v1183, %v1291
        %v1293 = vpop.f32.mrf.mxu0
        %1294 = vmatprep.mubr.bf16.mxu0 0
        %1295 = vmatmul.mubr.bf16.gmra.mxu0 %v1214
        %v1296 = vpop.f32.mrf.mxu0
        %v1297 = vadd.f32 %v1183, %v1296
        %v1298 = vpop.f32.mrf.mxu0
        %v1299 = vpop.f32.mrf.mxu0
        %v1300 = vadd.f32 %v1183, %v1299
        %v1301 = vpop.f32.mrf.mxu0
        %1302 = vmatprep.mubr.bf16.mxu0 0
        %1303 = vmatmul.mubr.bf16.gmra.mxu0 %v1217
        %v1304 = vpop.f32.mrf.mxu0
        %v1305 = vadd.f32 %v1183, %v1304
        %v1306 = vpop.f32.mrf.mxu0
        %v1307 = vpop.f32.mrf.mxu0
        %v1308 = vadd.f32 %v1183, %v1307
        %v1309 = vpop.f32.mrf.mxu0
        %1310 = vmatprep.mubr.bf16.mxu0 0
        %1311 = vmatmul.mubr.bf16.gmra.mxu0 %v1220
        %v1312 = vpop.f32.mrf.mxu0
        %v1313 = vadd.f32 %v1183, %v1312
        %v1314 = vpop.f32.mrf.mxu0
        %v1315 = vpop.f32.mrf.mxu0
        %v1316 = vadd.f32 %v1183, %v1315
        %v1317 = vpop.f32.mrf.mxu0
        %1318 = vdwg.mxu0
        %v1319 = vmax.f32 %v1257, 0.0
        %v1320 = vmax.f32 %v1260, 0.0
        %v1321 = vmax.f32 %v1265, 0.0
        %v1322 = vmax.f32 %v1268, 0.0
        %v1323 = vmax.f32 %v1273, 0.0
        %v1324 = vmax.f32 %v1276, 0.0
        %v1325 = vmax.f32 %v1281, 0.0
        %v1326 = vmax.f32 %v1284, 0.0
        %v1327 = vmax.f32 %v1289, 0.0
        %v1328 = vmax.f32 %v1292, 0.0
        %v1329 = vmax.f32 %v1297, 0.0
        %v1330 = vmax.f32 %v1300, 0.0
        %v1331 = vmax.f32 %v1305, 0.0
        %v1332 = vmax.f32 %v1308, 0.0
        %v1333 = vmax.f32 %v1313, 0.0
        %v1334 = vmax.f32 %v1316, 0.0
        %v1335 = vpack.c.bf16 %v1320, %v1319
        %v1336 = vpack.c.bf16 %v1322, %v1321
        %v1337 = vpack.c.bf16 %v1324, %v1323
        %v1338 = vpack.c.bf16 %v1326, %v1325
        %v1339 = vpack.c.bf16 %v1328, %v1327
        %v1340 = vpack.c.bf16 %v1330, %v1329
        %v1341 = vpack.c.bf16 %v1332, %v1331
        %v1342 = vpack.c.bf16 %v1334, %v1333
        %v1343 = vld [vmem:[#allocation7] sm:$0xff]
        %v1344 = vld [vmem:[#allocation7 + $0x8] sm:$0xff]
        %v1345 = vld [vmem:[#allocation7 + $0x10] sm:$0xff]
        %v1346 = vld [vmem:[#allocation7 + $0x18] sm:$0xff]
        %v1347 = vld [vmem:[#allocation7 + $0x20] sm:$0xff]
        %v1348 = vld [vmem:[#allocation7 + $0x28] sm:$0xff]
        %v1349 = vld [vmem:[#allocation7 + $0x30] sm:$0xff]
        %v1350 = vld [vmem:[#allocation7 + $0x38] sm:$0xff]
        %v1351 = vld [vmem:[#allocation7 + $0x40] sm:$0xff]
        %v1352 = vld [vmem:[#allocation7 + $0x48] sm:$0xff]
        %v1353 = vld [vmem:[#allocation7 + $0x50] sm:$0xff]
        %v1354 = vld [vmem:[#allocation7 + $0x58] sm:$0xff]
        %v1355 = vld [vmem:[#allocation7 + $0x60] sm:$0xff]
        %v1356 = vld [vmem:[#allocation7 + $0x68] sm:$0xff]
        %v1357 = vld [vmem:[#allocation7 + $0x70] sm:$0xff]
        %v1358 = vld [vmem:[#allocation7 + $0x78] sm:$0xff]
        %v1359 = vld [vmem:[%s9] sm:$0x3]
        %v1361 = vlaneseq
        %v1362 = vshrl.u32 %v1361, 7
        %v1363 = vsub.s32 0, %v1362
        %v1364 = vrot.slane %v1359, %v1363
        %v1365 = vlaneseq
        %v1366 = vshrl.u32 %v1365, 7
        %v1367 = vsub.s32 1, %v1366
        %v1368 = vrot.slane %v1359, %v1367
        %v1387 = vunpack.c.l.b16 %v1343
        %v1388 = vunpack.c.h.b16 %v1343
        %v1389 = vunpack.c.l.b16 %v1344
        %v1390 = vunpack.c.h.b16 %v1344
        %v1391 = vunpack.c.l.b16 %v1345
        %v1392 = vunpack.c.h.b16 %v1345
        %v1393 = vunpack.c.l.b16 %v1346
        %v1394 = vunpack.c.h.b16 %v1346
        %v1395 = vunpack.c.l.b16 %v1347
        %v1396 = vunpack.c.h.b16 %v1347
        %v1397 = vunpack.c.l.b16 %v1348
        %v1398 = vunpack.c.h.b16 %v1348
        %v1399 = vunpack.c.l.b16 %v1349
        %v1400 = vunpack.c.h.b16 %v1349
        %v1401 = vunpack.c.l.b16 %v1350
        %v1402 = vunpack.c.h.b16 %v1350
        %v1403 = vunpack.c.l.b16 %v1351
        %v1404 = vunpack.c.h.b16 %v1351
        %v1405 = vunpack.c.l.b16 %v1352
        %v1406 = vunpack.c.h.b16 %v1352
        %v1407 = vunpack.c.l.b16 %v1353
        %v1408 = vunpack.c.h.b16 %v1353
        %v1409 = vunpack.c.l.b16 %v1354
        %v1410 = vunpack.c.h.b16 %v1354
        %v1411 = vunpack.c.l.b16 %v1355
        %v1412 = vunpack.c.h.b16 %v1355
        %v1413 = vunpack.c.l.b16 %v1356
        %v1414 = vunpack.c.h.b16 %v1356
        %v1415 = vunpack.c.l.b16 %v1357
        %v1416 = vunpack.c.h.b16 %v1357
        %v1417 = vunpack.c.l.b16 %v1358
        %v1418 = vunpack.c.h.b16 %v1358
        %v1419 = vpack.c.b16 %v1389, %v1387
        %v1420 = vpack.c.b16 %v1390, %v1388
        %v1421 = vpack.c.b16 %v1393, %v1391
        %v1422 = vpack.c.b16 %v1394, %v1392
        %v1423 = vpack.c.b16 %v1397, %v1395
        %v1424 = vpack.c.b16 %v1398, %v1396
        %v1425 = vpack.c.b16 %v1401, %v1399
        %v1426 = vpack.c.b16 %v1402, %v1400
        %v1427 = vpack.c.b16 %v1405, %v1403
        %v1428 = vpack.c.b16 %v1406, %v1404
        %v1429 = vpack.c.b16 %v1409, %v1407
        %v1430 = vpack.c.b16 %v1410, %v1408
        %v1431 = vpack.c.b16 %v1413, %v1411
        %v1432 = vpack.c.b16 %v1414, %v1412
        %v1433 = vpack.c.b16 %v1417, %v1415
        %v1434 = vpack.c.b16 %v1418, %v1416
        %1451 = vmatprep.subr.bf16.mxu0 %v1434
        %1452 = vmatpush1.bf16.msra.mxu0 %v1433
        %1453 = vmatprep.subr.bf16.mxu0 %v1432
        %1454 = vmatpush1.bf16.msra.mxu0 %v1431
        %1455 = vmatprep.subr.bf16.mxu0 %v1430
        %1456 = vmatpush1.bf16.msra.mxu0 %v1429
        %1457 = vmatprep.subr.bf16.mxu0 %v1428
        %1458 = vmatpush1.bf16.msra.mxu0 %v1427
        %1459 = vmatprep.subr.bf16.mxu0 %v1426
        %1460 = vmatpush1.bf16.msra.mxu0 %v1425
        %1461 = vmatprep.subr.bf16.mxu0 %v1424
        %1462 = vmatpush1.bf16.msra.mxu0 %v1423
        %1463 = vmatprep.subr.bf16.mxu0 %v1422
        %1464 = vmatpush1.bf16.msra.mxu0 %v1421
        %1465 = vmatprep.subr.bf16.mxu0 %v1420
        %1466 = vmatpush1.bf16.msra.mxu0 %v1419
        %1467 = vmatprep.subr.bf16.mxu0 0
        %1468 = vmatpush2.bf16.msra.mxu0 0
        %1469 = vmatprep.subr.bf16.mxu0 0
        %1470 = vmatpush2.bf16.msra.mxu0 0
        %1471 = vmatprep.subr.bf16.mxu0 0
        %1472 = vmatpush2.bf16.msra.mxu0 0
        %1473 = vmatprep.subr.bf16.mxu0 0
        %1474 = vmatpush2.bf16.msra.mxu0 0
        %1475 = vmatprep.subr.bf16.mxu0 0
        %1476 = vmatpush2.bf16.msra.mxu0 0
        %1477 = vmatprep.subr.bf16.mxu0 0
        %1478 = vmatpush2.bf16.msra.mxu0 0
        %1479 = vmatprep.subr.bf16.mxu0 0
        %1480 = vmatpush2.bf16.msra.mxu0 0
        %1481 = vmatprep.subr.bf16.mxu0 0
        %1482 = vmatpush2.bf16.msra.mxu0 0
        %1483 = vmatprep.mubr.bf16.mxu0 0
        %1484 = vmatmul.mubr.bf16.gmra.mxu0 %v1335
        %v1485 = vpop.f32.mrf.mxu0
        %v1486 = vadd.f32 %v1364, %v1485
        %v1487 = vpop.f32.mrf.mxu0
        %v1488 = vadd.f32 %v1368, %v1487
        %v1489 = vpop.f32.mrf.mxu0
        %v1490 = vadd.f32 %v1364, %v1489
        %v1491 = vpop.f32.mrf.mxu0
        %v1492 = vadd.f32 %v1368, %v1491
        %1493 = vmatprep.mubr.bf16.mxu0 0
        %1494 = vmatmul.mubr.bf16.gmra.mxu0 %v1336
        %v1495 = vpop.f32.mrf.mxu0
        %v1496 = vadd.f32 %v1364, %v1495
        %v1497 = vpop.f32.mrf.mxu0
        %v1498 = vadd.f32 %v1368, %v1497
        %v1499 = vpop.f32.mrf.mxu0
        %v1500 = vadd.f32 %v1364, %v1499
        %v1501 = vpop.f32.mrf.mxu0
        %v1502 = vadd.f32 %v1368, %v1501
        %1503 = vmatprep.mubr.bf16.mxu0 0
        %1504 = vmatmul.mubr.bf16.gmra.mxu0 %v1337
        %v1505 = vpop.f32.mrf.mxu0
        %v1506 = vadd.f32 %v1364, %v1505
        %v1507 = vpop.f32.mrf.mxu0
        %v1508 = vadd.f32 %v1368, %v1507
        %v1509 = vpop.f32.mrf.mxu0
        %v1510 = vadd.f32 %v1364, %v1509
        %v1511 = vpop.f32.mrf.mxu0
        %v1512 = vadd.f32 %v1368, %v1511
        %1513 = vmatprep.mubr.bf16.mxu0 0
        %1514 = vmatmul.mubr.bf16.gmra.mxu0 %v1338
        %v1515 = vpop.f32.mrf.mxu0
        %v1516 = vadd.f32 %v1364, %v1515
        %v1517 = vpop.f32.mrf.mxu0
        %v1518 = vadd.f32 %v1368, %v1517
        %v1519 = vpop.f32.mrf.mxu0
        %v1520 = vadd.f32 %v1364, %v1519
        %v1521 = vpop.f32.mrf.mxu0
        %v1522 = vadd.f32 %v1368, %v1521
        %1523 = vmatprep.mubr.bf16.mxu0 0
        %1524 = vmatmul.mubr.bf16.gmra.mxu0 %v1339
        %v1525 = vpop.f32.mrf.mxu0
        %v1526 = vadd.f32 %v1364, %v1525
        %v1527 = vpop.f32.mrf.mxu0
        %v1528 = vadd.f32 %v1368, %v1527
        %v1529 = vpop.f32.mrf.mxu0
        %v1530 = vadd.f32 %v1364, %v1529
        %v1531 = vpop.f32.mrf.mxu0
        %v1532 = vadd.f32 %v1368, %v1531
        %1533 = vmatprep.mubr.bf16.mxu0 0
        %1534 = vmatmul.mubr.bf16.gmra.mxu0 %v1340
        %v1535 = vpop.f32.mrf.mxu0
        %v1536 = vadd.f32 %v1364, %v1535
        %v1537 = vpop.f32.mrf.mxu0
        %v1538 = vadd.f32 %v1368, %v1537
        %v1539 = vpop.f32.mrf.mxu0
        %v1540 = vadd.f32 %v1364, %v1539
        %v1541 = vpop.f32.mrf.mxu0
        %v1542 = vadd.f32 %v1368, %v1541
        %1543 = vmatprep.mubr.bf16.mxu0 0
        %1544 = vmatmul.mubr.bf16.gmra.mxu0 %v1341
        %v1545 = vpop.f32.mrf.mxu0
        %v1546 = vadd.f32 %v1364, %v1545
        %v1547 = vpop.f32.mrf.mxu0
        %v1548 = vadd.f32 %v1368, %v1547
        %v1549 = vpop.f32.mrf.mxu0
        %v1550 = vadd.f32 %v1364, %v1549
        %v1551 = vpop.f32.mrf.mxu0
        %v1552 = vadd.f32 %v1368, %v1551
        %1553 = vmatprep.mubr.bf16.mxu0 0
        %1554 = vmatmul.mubr.bf16.gmra.mxu0 %v1342
        %v1555 = vpop.f32.mrf.mxu0
        %v1556 = vadd.f32 %v1364, %v1555
        %v1557 = vpop.f32.mrf.mxu0
        %v1558 = vadd.f32 %v1368, %v1557
        %v1559 = vpop.f32.mrf.mxu0
        %v1560 = vadd.f32 %v1364, %v1559
        %v1561 = vpop.f32.mrf.mxu0
        %v1562 = vadd.f32 %v1368, %v1561
        %1563 = vdwg.mxu0
        %1564 = vst [vmem:[%s446] sm:$0xff] %v1486
        %1565 = vst [vmem:[%s446 + $0x8] sm:$0xff] %v1488
        %1566 = vst [vmem:[%s446 + $0x10] sm:$0xff] %v1490
        %1567 = vst [vmem:[%s446 + $0x18] sm:$0xff] %v1492
        %1568 = vst [vmem:[%s446 + $0x20] sm:$0xff] %v1496
        %1569 = vst [vmem:[%s446 + $0x28] sm:$0xff] %v1498
        %1570 = vst [vmem:[%s446 + $0x30] sm:$0xff] %v1500
        %1571 = vst [vmem:[%s446 + $0x38] sm:$0xff] %v1502
        %1572 = vst [vmem:[%s446 + $0x40] sm:$0xff] %v1506
        %1573 = vst [vmem:[%s446 + $0x48] sm:$0xff] %v1508
        %1574 = vst [vmem:[%s446 + $0x50] sm:$0xff] %v1510
        %1575 = vst [vmem:[%s446 + $0x58] sm:$0xff] %v1512
        %1576 = vst [vmem:[%s446 + $0x60] sm:$0xff] %v1516
        %1577 = vst [vmem:[%s446 + $0x68] sm:$0xff] %v1518
        %1578 = vst [vmem:[%s446 + $0x70] sm:$0xff] %v1520
        %1579 = vst [vmem:[%s446 + $0x78] sm:$0xff] %v1522
        %1580 = vst [vmem:[%s446 + $0x80] sm:$0xff] %v1526
        %1581 = vst [vmem:[%s446 + $0x88] sm:$0xff] %v1528
        %1582 = vst [vmem:[%s446 + $0x90] sm:$0xff] %v1530
        %1583 = vst [vmem:[%s446 + $0x98] sm:$0xff] %v1532
        %1584 = vst [vmem:[%s446 + $0xa0] sm:$0xff] %v1536
        %1585 = vst [vmem:[%s446 + $0xa8] sm:$0xff] %v1538
        %1586 = vst [vmem:[%s446 + $0xb0] sm:$0xff] %v1540
        %1587 = vst [vmem:[%s446 + $0xb8] sm:$0xff] %v1542
        %1588 = vst [vmem:[%s446 + $0xc0] sm:$0xff] %v1546
        %1589 = vst [vmem:[%s446 + $0xc8] sm:$0xff] %v1548
        %1590 = vst [vmem:[%s446 + $0xd0] sm:$0xff] %v1550
        %1591 = vst [vmem:[%s446 + $0xd8] sm:$0xff] %v1552
        %1592 = vst [vmem:[%s446 + $0xe0] sm:$0xff] %v1556
        %1593 = vst [vmem:[%s446 + $0xe8] sm:$0xff] %v1558
        %1594 = vst [vmem:[%s446 + $0xf0] sm:$0xff] %v1560
        %1595 = vst [vmem:[%s446 + $0xf8] sm:$0xff] %v1562
        %s1596 = sand.u32 %s259, 1
        %s1597 = scalar_lea.sflag [#allocation4], %s1596
        %s1598 = sand.u32 %s259, 1
        %s1599 = smul.addr %s1598, 256
        %s1600 = scalar_lea.vmem [#allocation8], %s1599
        %s1601 = sand.u32 %s285, 1
        %s1602 = scalar_lea.sflag [#allocation10], %s1601
        %s1603 = sand.u32 %s285, 1
        %s1604 = smul.addr %s1603, 128
        %s1605 = scalar_lea.vmem [#allocation9], %s1604
        // Predicated region
        $region73: #{tpu_custom_call.1} parent=59 // pred_check
          %p1606 = pneg %p269
        $region74: #{tpu_custom_call.1} parent=59 // pred_check_branch
          %1608 = sbr.rel (%p1606) target = $region76
        $region75: #{tpu_custom_call.1} parent=59 // pred_region
          %s1609 = smul.u32 16, %s31
          %s1611 = ssub.s32 4096, 4096
          %1612 = vsyncadd %s1597, %s1611
          %s1613 = smul.addr %s1609, 2
          %s1614 = smul.addr %s1613, 128
          %s1615 = scalar_lea.hbm %s10, %s1614
          %s1616 = sshll.u32 %s1600, 4
          %s1617 = int_to_ptr.vmem [resolvable:$true] %s1616
          %1622 = dma.vmem_to_hbm [thread:$0]  %s1617, 4096, %s1615, %s1597, 256, 256, 16
        $region76: #{tpu_custom_call.1} parent=59 // pred_fallthru
          _
        // Predicated region
        $region77: #{tpu_custom_call.1} parent=59 // pred_check
          %p1623 = pneg %p295
        $region78: #{tpu_custom_call.1} parent=59 // pred_check_branch
          %1625 = sbr.rel (%p1623) target = $region80
        $region79: #{tpu_custom_call.1} parent=59 // pred_region
          %s1626 = smul.u32 16, %s31
          %s1628 = ssub.s32 2048, 2048
          %1629 = vsyncadd %s1602, %s1628
          %s1630 = smul.addr %s1626, 128
          %s1631 = scalar_lea.hbm %s11, %s1630
          %s1632 = sshll.u32 %s1605, 4
          %s1633 = int_to_ptr.vmem [resolvable:$true] %s1632
          %1638 = dma.vmem_to_hbm [thread:$0]  %s1633, 2048, %s1631, %s1602, 128, 128, 8
        $region80: #{tpu_custom_call.1} parent=59 // pred_fallthru
          _
      $region60: #{tpu_custom_call.1} parent=5 // pred_fallthru
        _
      %p1639 = scmp.le.s32.totalorder 2, %s26
      // Predicated region
      $region81: #{tpu_custom_call.1} parent=5 // pred_check
        %p1640 = pneg %p1639
      $region82: #{tpu_custom_call.1} parent=5 // pred_check_branch
        %1642 = sbr.rel (%p1640) target = $region84
      $region83: #{tpu_custom_call.1} parent=5 // pred_region
        %s1643 = ssub.s32 %s26, 2
        // Predicated region
        $region85: #{tpu_custom_call.1} parent=83 // pred_check
          %p1644 = pneg %p275
        $region86: #{tpu_custom_call.1} parent=83 // pred_check_branch
          %1646 = sbr.rel (%p1644) target = $region88
        $region87: #{tpu_custom_call.1} parent=83 // pred_region
          %s1647 = sand.u32 %s260, 1
          %s1648 = scalar_lea.sflag [#allocation4], %s1647
          %s1649 = sand.u32 %s260, 1
          %s1650 = smul.addr %s1649, 256
          %s1651 = scalar_lea.vmem [#allocation8], %s1650
          %1652 = dma.done %s1648, 4096
        $region88: #{tpu_custom_call.1} parent=83 // pred_fallthru
          _
        // Predicated region
        $region89: #{tpu_custom_call.1} parent=83 // pred_check
          %p1653 = pneg %p301
        $region90: #{tpu_custom_call.1} parent=83 // pred_check_branch
          %1655 = sbr.rel (%p1653) target = $region92
        $region91: #{tpu_custom_call.1} parent=83 // pred_region
          %s1656 = sand.u32 %s286, 1
          %s1657 = scalar_lea.sflag [#allocation10], %s1656
          %s1658 = sand.u32 %s286, 1
          %s1659 = smul.addr %s1658, 128
          %s1660 = scalar_lea.vmem [#allocation9], %s1659
          %1661 = dma.done %s1657, 2048
        $region92: #{tpu_custom_call.1} parent=83 // pred_fallthru
          _
      $region84: #{tpu_custom_call.1} parent=5 // pred_fallthru
        _
    $region6: #{tpu_custom_call.1} parent=1 // loop_footer
      %s30 = sadd.s32 1, %s26
    $region7: #{tpu_custom_call.1} parent=1 // loop_footer_branch
      %25 = sbr.rel target = $region3
    $region8: #{tpu_custom_call.1} parent=1 // loop_exit
      _
    %1662 = vsyncpa [#allocation3], 1
    %s1663 = scalar_lea.sflag [#allocation3], 1
    %1664 = vsyncpa %s1663, 1
    %1665 = vsyncpa [#allocation6], 1
    %1666 = vsyncpa [#allocation4], 1
    %s1667 = scalar_lea.sflag [#allocation4], 1
    %1668 = vsyncpa %s1667, 1
    %1669 = vsyncpa [#allocation10], 1
    %s1670 = scalar_lea.sflag [#allocation10], 1
    %1671 = vsyncpa %s1670, 1

</llo_original>
